<compile_context>
chip_gen: v5e
topology: v5e:2x2
jax: 0.10.0
libtpu: 0.0.40
codegen_flags: <defaults>
</compile_context>

<pallas_src>
import math
from functools import partial

import jax
import jax.numpy as jnp
from jax import lax
from jax.experimental import pallas as pl
from jax.experimental.pallas import tpu as pltpu


def _layernorm(v, gamma, beta, eps=1e-5):
    # one-pass variance: E[x^2] - mu^2  (halves the cross-lane reductions)
    mu = jnp.mean(v, axis=-1, keepdims=True)
    mu2 = jnp.mean(v * v, axis=-1, keepdims=True)
    var = jnp.maximum(mu2 - mu * mu, 0.0)
    return (v - mu) * lax.rsqrt(var + eps) * gamma + beta


def _gelu_exact(x):
    # nn.GELU() default = exact erf-based GELU
    return 0.5 * x * (1.0 + lax.erf(x * (1.0 / math.sqrt(2.0))))


def gpt2_block_kernel(x_ref,
                      ln1_g_ref, ln1_b_ref,
                      wq_ref, bq_ref, wk_ref, bk_ref, wv_ref, bv_ref,
                      wo_ref, bo_ref,
                      ln2_g_ref, ln2_b_ref,
                      w1_ref, b1_ref, w2_ref, b2_ref,
                      o_ref,
                      k_sc, v_sc,
                      *, num_heads, q_tile):
    i = pl.program_id(1)               # q-tile index within this batch element
    S = x_ref.shape[1]
    D = x_ref.shape[2]
    TQ = q_tile
    H = num_heads
    hd = D // H
    scale = 1.0 / math.sqrt(hd)
    cdt = wq_ref.dtype                 # MXU compute dtype (bf16)

    ln1_g = ln1_g_ref[...]
    ln1_b = ln1_b_ref[...]

    # ---- K/V for the full sequence: computed once per batch, cached in VMEM ----
    @pl.when(i == 0)
    def _():
        xn_f = _layernorm(x_ref[0], ln1_g, ln1_b).astype(cdt)          # (S, D)
        k = jnp.dot(xn_f, wk_ref[...],
                    preferred_element_type=jnp.float32) + bk_ref[...]
        v = jnp.dot(xn_f, wv_ref[...],
                    preferred_element_type=jnp.float32) + bv_ref[...]
        k_sc[...] = k.astype(k_sc.dtype)
        v_sc[...] = v.astype(v_sc.dtype)

    # ---- per-q-tile work ----
    row0 = pl.multiple_of(i * TQ, TQ)
    x_q = x_ref[0, pl.ds(row0, TQ), :]                                 # (TQ, D) f32
    xn_q = _layernorm(x_q, ln1_g, ln1_b).astype(cdt)
    q = jnp.dot(xn_q, wq_ref[...],
                preferred_element_type=jnp.float32) + bq_ref[...]
    q = (q * scale).astype(cdt)                                        # (TQ, D)

    # attention: per-head, accumulate output projection (no concat / relayout copy)
    attn = jnp.zeros((TQ, D), jnp.float32)
    for h in range(H):                                                 # static loop
        qh = q[:, h * hd:(h + 1) * hd]                                 # (TQ, hd) bf16
        kh = k_sc[:, h * hd:(h + 1) * hd]                              # (S, hd)  bf16
        vh = v_sc[:, h * hd:(h + 1) * hd]                              # (S, hd)  bf16
        # QK^T with S as the wide MXU output dim (contract head dim directly)
        s = jnp.einsum('qd,kd->qk', qh, kh,
                       preferred_element_type=jnp.float32)             # (TQ, S) f32
        s = s - jnp.max(s, axis=-1, keepdims=True)
        p = jnp.exp(s)
        p = p * pl.reciprocal(jnp.sum(p, axis=-1, keepdims=True), approx=True)
        ctx = jnp.dot(p.astype(cdt), vh,
                      preferred_element_type=jnp.float32)              # (TQ, hd)
        attn = attn + jnp.dot(ctx.astype(cdt), wo_ref[h * hd:(h + 1) * hd, :],
                              preferred_element_type=jnp.float32)      # (TQ, D)
    attn = attn + bo_ref[...]

    # residual (dropout = identity in eval)
    x1 = x_q + attn

    # ---- LN2 + MLP ----
    xn2 = _layernorm(x1, ln2_g_ref[...], ln2_b_ref[...]).astype(cdt)
    h1 = jnp.dot(xn2, w1_ref[...],
                 preferred_element_type=jnp.float32) + b1_ref[...]     # (TQ, d_ff) f32
    h1 = _gelu_exact(h1)
    h2 = jnp.dot(h1.astype(cdt), w2_ref[...],
                 preferred_element_type=jnp.float32) + b2_ref[...]     # (TQ, D) f32

    o_ref[0] = (x1 + h2).astype(o_ref.dtype)


def _choose_q_tile(S):
    for t in (256, 128, 64, 32, 16, 8):
        if t <= S and S % t == 0:
            return t
    return S  # odd small sequence: single full-size tile


def gpt2_block(x, params, *, num_heads, compute_dtype=jnp.bfloat16):
    """x: (B, S, D) float32. params: dict of PyTorch-convention weights."""
    B, S, D = x.shape
    assert D % num_heads == 0
    d_ff = params["w1"].shape[0]
    f32 = jnp.float32
    cdt = compute_dtype

    TQ = _choose_q_tile(S)
    nq = S // TQ

    # Pre-transpose weights (PyTorch Linear stores (out, in)); cast matmul weights
    # to bf16, keep biases / LN params f32 (added after f32 accumulation).
    w_in = params["in_proj_weight"]            # (3D, D): rows [q; k; v]
    b_in = params["in_proj_bias"]              # (3D,)
    wq_t = w_in[0 * D:1 * D, :].T.astype(cdt)  # (D, D)
    wk_t = w_in[1 * D:2 * D, :].T.astype(cdt)
    wv_t = w_in[2 * D:3 * D, :].T.astype(cdt)
    bq = b_in[0 * D:1 * D].reshape(1, D).astype(f32)
    bk = b_in[1 * D:2 * D].reshape(1, D).astype(f32)
    bv = b_in[2 * D:3 * D].reshape(1, D).astype(f32)
    wo_t = params["out_proj_weight"].T.astype(cdt)        # (D, D)
    bo = params["out_proj_bias"].reshape(1, D).astype(f32)
    w1_t = params["w1"].T.astype(cdt)                     # (D, d_ff)
    b1 = params["b1"].reshape(1, d_ff).astype(f32)
    w2_t = params["w2"].T.astype(cdt)                     # (d_ff, D)
    b2 = params["b2"].reshape(1, D).astype(f32)
    ln1_g = params["ln1_g"].reshape(1, D).astype(f32)
    ln1_b = params["ln1_b"].reshape(1, D).astype(f32)
    ln2_g = params["ln2_g"].reshape(1, D).astype(f32)
    ln2_b = params["ln2_b"].reshape(1, D).astype(f32)

    def const_spec(a):
        nd = a.ndim
        return pl.BlockSpec(a.shape, lambda b, i, _nd=nd: (0,) * _nd)

    kernel = partial(gpt2_block_kernel, num_heads=num_heads, q_tile=TQ)

    return pl.pallas_call(
        kernel,
        out_shape=jax.ShapeDtypeStruct((B, S, D), x.dtype),
        grid=(B, nq),
        in_specs=[
            # full sequence per batch (block index invariant in i -> DMA'd once per batch)
            pl.BlockSpec((1, S, D), lambda b, i: (b, 0, 0)),
            const_spec(ln1_g), const_spec(ln1_b),
            const_spec(wq_t), const_spec(bq),
            const_spec(wk_t), const_spec(bk),
            const_spec(wv_t), const_spec(bv),
            const_spec(wo_t), const_spec(bo),
            const_spec(ln2_g), const_spec(ln2_b),
            const_spec(w1_t), const_spec(b1),
            const_spec(w2_t), const_spec(b2),
        ],
        out_specs=pl.BlockSpec((1, TQ, D), lambda b, i: (b, i, 0)),
        scratch_shapes=[
            pltpu.VMEM((S, D), cdt),   # K cache (persists across q-tiles of a batch)
            pltpu.VMEM((S, D), cdt),   # V cache
        ],
        compiler_params=pltpu.CompilerParams(
            # q-tile axis must run in order per batch (K/V scratch carry) -> arbitrary
            dimension_semantics=("parallel", "arbitrary"),
            vmem_limit_bytes=64 * 1024 * 1024,
        ),
    )(x, ln1_g, ln1_b, wq_t, bq, wk_t, bk, wv_t, bv, wo_t, bo,
      ln2_g, ln2_b, w1_t, b1, w2_t, b2)


def init_params(key, d_model, d_ff):
    ks = jax.random.split(key, 6)
    std = 0.02
    return {
        "ln1_g": jnp.ones((d_model,), jnp.float32),
        "ln1_b": jnp.zeros((d_model,), jnp.float32),
        "in_proj_weight": std * jax.random.normal(ks[0], (3 * d_model, d_model), jnp.float32),
        "in_proj_bias": jnp.zeros((3 * d_model,), jnp.float32),
        "out_proj_weight": std * jax.random.normal(ks[1], (d_model, d_model), jnp.float32),
        "out_proj_bias": jnp.zeros((d_model,), jnp.float32),
        "ln2_g": jnp.ones((d_model,), jnp.float32),
        "ln2_b": jnp.zeros((d_model,), jnp.float32),
        "w1": std * jax.random.normal(ks[2], (d_ff, d_model), jnp.float32),
        "b1": jnp.zeros((d_ff,), jnp.float32),
        "w2": std * jax.random.normal(ks[3], (d_model, d_ff), jnp.float32),
        "b2": jnp.zeros((d_model,), jnp.float32),
    }


if __name__ == "__main__":
    B, S, D, H, FF = 2, 8, 32, 4, 64
    key = jax.random.PRNGKey(0)
    kx, kp = jax.random.split(key)
    x = jax.random.normal(kx, (B, S, D), jnp.float32)
    params = init_params(kp, D, FF)

    out = gpt2_block(x, params, num_heads=H)
    jax.block_until_ready(out)
    assert out.shape == (B, S, D), out.shape
    print("KERNEL_OK")
</pallas_src>

<mosaic_0001>
module attributes {stable_mosaic.version = 11 : i64} {
  func.func @gpt2_block_kernel(%arg0: i32, %arg1: i32, %arg2: memref<1x8x32xf32, #tpu.memory_space<vmem>>, %arg3: memref<1x32xf32, #tpu.memory_space<vmem>>, %arg4: memref<1x32xf32, #tpu.memory_space<vmem>>, %arg5: memref<32x32xbf16, #tpu.memory_space<vmem>>, %arg6: memref<1x32xf32, #tpu.memory_space<vmem>>, %arg7: memref<32x32xbf16, #tpu.memory_space<vmem>>, %arg8: memref<1x32xf32, #tpu.memory_space<vmem>>, %arg9: memref<32x32xbf16, #tpu.memory_space<vmem>>, %arg10: memref<1x32xf32, #tpu.memory_space<vmem>>, %arg11: memref<32x32xbf16, #tpu.memory_space<vmem>>, %arg12: memref<1x32xf32, #tpu.memory_space<vmem>>, %arg13: memref<1x32xf32, #tpu.memory_space<vmem>>, %arg14: memref<1x32xf32, #tpu.memory_space<vmem>>, %arg15: memref<32x64xbf16, #tpu.memory_space<vmem>>, %arg16: memref<1x64xf32, #tpu.memory_space<vmem>>, %arg17: memref<64x32xbf16, #tpu.memory_space<vmem>>, %arg18: memref<1x32xf32, #tpu.memory_space<vmem>>, %arg19: memref<1x8x32xf32, #tpu.memory_space<vmem>>, %arg20: memref<8x32xbf16, #tpu.memory_space<vmem>>, %arg21: memref<8x32xbf16, #tpu.memory_space<vmem>>) attributes {dimension_semantics = [#tpu.dimension_semantics<parallel>, #tpu.dimension_semantics<arbitrary>], iteration_bounds = array<i64: 2, 1>, scalar_prefetch = 0 : i64, scratch_operands = 2 : i64, tpu.core_type = #tpu.core_type<tc>, window_params = [{transform_indices = @transform_0, window_bounds = array<i64: 1, 8, 32>}, {pipeline_mode = #tpu.pipeline_mode<synchronous>, transform_indices = @transform_1, window_bounds = array<i64: 1, 32>}, {pipeline_mode = #tpu.pipeline_mode<synchronous>, transform_indices = @transform_2, window_bounds = array<i64: 1, 32>}, {pipeline_mode = #tpu.pipeline_mode<synchronous>, transform_indices = @transform_3, window_bounds = array<i64: 32, 32>}, {pipeline_mode = #tpu.pipeline_mode<synchronous>, transform_indices = @transform_4, window_bounds = array<i64: 1, 32>}, {pipeline_mode = #tpu.pipeline_mode<synchronous>, transform_indices = @transform_5, window_bounds = array<i64: 32, 32>}, {pipeline_mode = #tpu.pipeline_mode<synchronous>, transform_indices = @transform_6, window_bounds = array<i64: 1, 32>}, {pipeline_mode = #tpu.pipeline_mode<synchronous>, transform_indices = @transform_7, window_bounds = array<i64: 32, 32>}, {pipeline_mode = #tpu.pipeline_mode<synchronous>, transform_indices = @transform_8, window_bounds = array<i64: 1, 32>}, {pipeline_mode = #tpu.pipeline_mode<synchronous>, transform_indices = @transform_9, window_bounds = array<i64: 32, 32>}, {pipeline_mode = #tpu.pipeline_mode<synchronous>, transform_indices = @transform_10, window_bounds = array<i64: 1, 32>}, {pipeline_mode = #tpu.pipeline_mode<synchronous>, transform_indices = @transform_11, window_bounds = array<i64: 1, 32>}, {pipeline_mode = #tpu.pipeline_mode<synchronous>, transform_indices = @transform_12, window_bounds = array<i64: 1, 32>}, {pipeline_mode = #tpu.pipeline_mode<synchronous>, transform_indices = @transform_13, window_bounds = array<i64: 32, 64>}, {pipeline_mode = #tpu.pipeline_mode<synchronous>, transform_indices = @transform_14, window_bounds = array<i64: 1, 64>}, {pipeline_mode = #tpu.pipeline_mode<synchronous>, transform_indices = @transform_15, window_bounds = array<i64: 64, 32>}, {pipeline_mode = #tpu.pipeline_mode<synchronous>, transform_indices = @transform_16, window_bounds = array<i64: 1, 32>}, {transform_indices = @transform_17, window_bounds = array<i64: 1, 8, 32>}]} {
    %c0 = arith.constant 0 : index
    %c0_0 = arith.constant 0 : index
    %0 = vector.load %arg3[%c0, %c0_0] : memref<1x32xf32, #tpu.memory_space<vmem>>, vector<1x32xf32>
    %c0_1 = arith.constant 0 : index
    %c0_2 = arith.constant 0 : index
    %1 = vector.load %arg4[%c0_1, %c0_2] : memref<1x32xf32, #tpu.memory_space<vmem>>, vector<1x32xf32>
    %c0_i32 = arith.constant 0 : i32
    %2 = arith.cmpi eq, %arg1, %c0_i32 : i32
    %3 = arith.extui %2 : i1 to i32
    %c0_i32_3 = arith.constant 0 : i32
    %4 = arith.cmpi ne, %3, %c0_i32_3 : i32
    scf.if %4 {
      %c0_87 = arith.constant 0 : index
      %c0_88 = arith.constant 0 : index
      %c0_89 = arith.constant 0 : index
      %178 = vector.load %arg2[%c0_87, %c0_88, %c0_89] : memref<1x8x32xf32, #tpu.memory_space<vmem>>, vector<1x8x32xf32>
      %179 = vector.shape_cast %178 : vector<1x8x32xf32> to vector<8x32xf32>
      %cst_90 = arith.constant dense<0.000000e+00> : vector<8xf32>
      %180 = vector.multi_reduction <add>, %179, %cst_90 [1] : vector<8x32xf32> to vector<8xf32>
      %181 = vector.shape_cast %180 : vector<8xf32> to vector<8x1xf32>
      %cst_91 = arith.constant 3.200000e+01 : f32
      %182 = vector.broadcast %cst_91 : f32 to vector<8x1xf32>
      %183 = arith.divf %181, %182 : vector<8x1xf32>
      %184 = arith.mulf %179, %179 : vector<8x32xf32>
      %cst_92 = arith.constant dense<0.000000e+00> : vector<8xf32>
      %185 = vector.multi_reduction <add>, %184, %cst_92 [1] : vector<8x32xf32> to vector<8xf32>
      %186 = vector.shape_cast %185 : vector<8xf32> to vector<8x1xf32>
      %cst_93 = arith.constant 3.200000e+01 : f32
      %187 = vector.broadcast %cst_93 : f32 to vector<8x1xf32>
      %188 = arith.divf %186, %187 : vector<8x1xf32>
      %189 = arith.mulf %183, %183 : vector<8x1xf32>
      %190 = arith.subf %188, %189 : vector<8x1xf32>
      %cst_94 = arith.constant 0.000000e+00 : f32
      %191 = vector.broadcast %cst_94 : f32 to vector<8x1xf32>
      %192 = arith.maximumf %190, %191 : vector<8x1xf32>
      %193 = vector.broadcast %183 : vector<8x1xf32> to vector<8x32xf32>
      %194 = arith.subf %179, %193 : vector<8x32xf32>
      %cst_95 = arith.constant 9.99999974E-6 : f32
      %195 = vector.broadcast %cst_95 : f32 to vector<8x1xf32>
      %196 = arith.addf %192, %195 : vector<8x1xf32>
      %197 = math.rsqrt %196 : vector<8x1xf32>
      %198 = vector.broadcast %197 : vector<8x1xf32> to vector<8x32xf32>
      %199 = arith.mulf %194, %198 : vector<8x32xf32>
      %200 = vector.broadcast %0 : vector<1x32xf32> to vector<8x32xf32>
      %201 = arith.mulf %199, %200 : vector<8x32xf32>
      %202 = vector.broadcast %1 : vector<1x32xf32> to vector<8x32xf32>
      %203 = arith.addf %201, %202 : vector<8x32xf32>
      %204 = arith.truncf %203 : vector<8x32xf32> to vector<8x32xbf16>
      %c0_96 = arith.constant 0 : index
      %c0_97 = arith.constant 0 : index
      %205 = vector.load %arg7[%c0_96, %c0_97] : memref<32x32xbf16, #tpu.memory_space<vmem>>, vector<32x32xbf16>
      %cst_98 = arith.constant dense<0.000000e+00> : vector<8x32xf32>
      %206 = tpu.matmul %204, %205, %cst_98 {dimension_numbers = #tpu.dot_dimension_numbers<[1], [0], [0], [1], [0, 0, 1, 1], [], []>} : vector<8x32xbf16>, vector<32x32xbf16>, vector<8x32xf32> -> vector<8x32xf32>
      %c0_99 = arith.constant 0 : index
      %c0_100 = arith.constant 0 : index
      %207 = vector.load %arg8[%c0_99, %c0_100] : memref<1x32xf32, #tpu.memory_space<vmem>>, vector<1x32xf32>
      %208 = vector.broadcast %207 : vector<1x32xf32> to vector<8x32xf32>
      %209 = arith.addf %206, %208 : vector<8x32xf32>
      %c0_101 = arith.constant 0 : index
      %c0_102 = arith.constant 0 : index
      %210 = vector.load %arg9[%c0_101, %c0_102] : memref<32x32xbf16, #tpu.memory_space<vmem>>, vector<32x32xbf16>
      %cst_103 = arith.constant dense<0.000000e+00> : vector<8x32xf32>
      %211 = tpu.matmul %204, %210, %cst_103 {dimension_numbers = #tpu.dot_dimension_numbers<[1], [0], [0], [1], [0, 0, 1, 1], [], []>} : vector<8x32xbf16>, vector<32x32xbf16>, vector<8x32xf32> -> vector<8x32xf32>
      %c0_104 = arith.constant 0 : index
      %c0_105 = arith.constant 0 : index
      %212 = vector.load %arg10[%c0_104, %c0_105] : memref<1x32xf32, #tpu.memory_space<vmem>>, vector<1x32xf32>
      %213 = vector.broadcast %212 : vector<1x32xf32> to vector<8x32xf32>
      %214 = arith.addf %211, %213 : vector<8x32xf32>
      %215 = arith.truncf %209 : vector<8x32xf32> to vector<8x32xbf16>
      %c0_106 = arith.constant 0 : index
      %c0_107 = arith.constant 0 : index
      %216 = vector.load %arg20[%c0_106, %c0_107] : memref<8x32xbf16, #tpu.memory_space<vmem>>, vector<8x32xbf16>
      tpu.vector_store %arg20[%c0_106, %c0_107], %215 {strides = array<i32>} : memref<8x32xbf16, #tpu.memory_space<vmem>>, vector<8x32xbf16>,
      %217 = arith.truncf %214 : vector<8x32xf32> to vector<8x32xbf16>
      %c0_108 = arith.constant 0 : index
      %c0_109 = arith.constant 0 : index
      %218 = vector.load %arg21[%c0_108, %c0_109] : memref<8x32xbf16, #tpu.memory_space<vmem>>, vector<8x32xbf16>
      tpu.vector_store %arg21[%c0_108, %c0_109], %217 {strides = array<i32>} : memref<8x32xbf16, #tpu.memory_space<vmem>>, vector<8x32xbf16>,
    } else {
    }
    %c8_i32 = arith.constant 8 : i32
    %5 = arith.muli %arg1, %c8_i32 : i32
    %6 = tpu.assume_multiple %5, 8 : i32
    %c0_4 = arith.constant 0 : index
    %7 = arith.index_cast %6 : i32 to index
    %c0_5 = arith.constant 0 : index
    %8 = vector.load %arg2[%c0_4, %7, %c0_5] : memref<1x8x32xf32, #tpu.memory_space<vmem>>, vector<1x8x32xf32>
    %9 = vector.shape_cast %8 : vector<1x8x32xf32> to vector<8x32xf32>
    %cst = arith.constant dense<0.000000e+00> : vector<8xf32>
    %10 = vector.multi_reduction <add>, %9, %cst [1] : vector<8x32xf32> to vector<8xf32>
    %11 = vector.shape_cast %10 : vector<8xf32> to vector<8x1xf32>
    %cst_6 = arith.constant 3.200000e+01 : f32
    %12 = vector.broadcast %cst_6 : f32 to vector<8x1xf32>
    %13 = arith.divf %11, %12 : vector<8x1xf32>
    %14 = arith.mulf %9, %9 : vector<8x32xf32>
    %cst_7 = arith.constant dense<0.000000e+00> : vector<8xf32>
    %15 = vector.multi_reduction <add>, %14, %cst_7 [1] : vector<8x32xf32> to vector<8xf32>
    %16 = vector.shape_cast %15 : vector<8xf32> to vector<8x1xf32>
    %cst_8 = arith.constant 3.200000e+01 : f32
    %17 = vector.broadcast %cst_8 : f32 to vector<8x1xf32>
    %18 = arith.divf %16, %17 : vector<8x1xf32>
    %19 = arith.mulf %13, %13 : vector<8x1xf32>
    %20 = arith.subf %18, %19 : vector<8x1xf32>
    %cst_9 = arith.constant 0.000000e+00 : f32
    %21 = vector.broadcast %cst_9 : f32 to vector<8x1xf32>
    %22 = arith.maximumf %20, %21 : vector<8x1xf32>
    %23 = vector.broadcast %13 : vector<8x1xf32> to vector<8x32xf32>
    %24 = arith.subf %9, %23 : vector<8x32xf32>
    %cst_10 = arith.constant 9.99999974E-6 : f32
    %25 = vector.broadcast %cst_10 : f32 to vector<8x1xf32>
    %26 = arith.addf %22, %25 : vector<8x1xf32>
    %27 = math.rsqrt %26 : vector<8x1xf32>
    %28 = vector.broadcast %27 : vector<8x1xf32> to vector<8x32xf32>
    %29 = arith.mulf %24, %28 : vector<8x32xf32>
    %30 = vector.broadcast %0 : vector<1x32xf32> to vector<8x32xf32>
    %31 = arith.mulf %29, %30 : vector<8x32xf32>
    %32 = vector.broadcast %1 : vector<1x32xf32> to vector<8x32xf32>
    %33 = arith.addf %31, %32 : vector<8x32xf32>
    %34 = arith.truncf %33 : vector<8x32xf32> to vector<8x32xbf16>
    %c0_11 = arith.constant 0 : index
    %c0_12 = arith.constant 0 : index
    %35 = vector.load %arg5[%c0_11, %c0_12] : memref<32x32xbf16, #tpu.memory_space<vmem>>, vector<32x32xbf16>
    %cst_13 = arith.constant dense<0.000000e+00> : vector<8x32xf32>
    %36 = tpu.matmul %34, %35, %cst_13 {dimension_numbers = #tpu.dot_dimension_numbers<[1], [0], [0], [1], [0, 0, 1, 1], [], []>} : vector<8x32xbf16>, vector<32x32xbf16>, vector<8x32xf32> -> vector<8x32xf32>
    %c0_14 = arith.constant 0 : index
    %c0_15 = arith.constant 0 : index
    %37 = vector.load %arg6[%c0_14, %c0_15] : memref<1x32xf32, #tpu.memory_space<vmem>>, vector<1x32xf32>
    %38 = vector.broadcast %37 : vector<1x32xf32> to vector<8x32xf32>
    %39 = arith.addf %36, %38 : vector<8x32xf32>
    %cst_16 = arith.constant 0.353553385 : f32
    %40 = vector.broadcast %cst_16 : f32 to vector<8x32xf32>
    %41 = arith.mulf %39, %40 : vector<8x32xf32>
    %42 = arith.truncf %41 : vector<8x32xf32> to vector<8x32xbf16>
    %cst_17 = arith.constant 0.000000e+00 : f32
    %43 = vector.broadcast %cst_17 : f32 to vector<8x32xf32>
    %44 = vector.extract_strided_slice %42 {offsets = [0, 0], sizes = [8, 8], strides = [1, 1]} : vector<8x32xbf16> to vector<8x8xbf16>
    %c0_18 = arith.constant 0 : index
    %c0_19 = arith.constant 0 : index
    %45 = vector.load %arg20[%c0_18, %c0_19] : memref<8x32xbf16, #tpu.memory_space<vmem>>, vector<8x8xbf16>
    %c0_20 = arith.constant 0 : index
    %c0_21 = arith.constant 0 : index
    %46 = vector.load %arg21[%c0_20, %c0_21] : memref<8x32xbf16, #tpu.memory_space<vmem>>, vector<8x8xbf16>
    "tpu.trace_start"() <{level = 10 : i32, message = "qd,kd->qk"}> : () -> ()
    %cst_22 = arith.constant dense<0.000000e+00> : vector<8x8xf32>
    %47 = tpu.matmul %44, %45, %cst_22 {dimension_numbers = #tpu.dot_dimension_numbers<[1], [1], [0], [0], [0, 0, 1, 0], [], []>} : vector<8x8xbf16>, vector<8x8xbf16>, vector<8x8xf32> -> vector<8x8xf32>
    "tpu.trace_stop"() : () -> ()
    %cst_23 = arith.constant dense<0xFF800000> : vector<8xf32>
    %48 = vector.multi_reduction <maximumf>, %47, %cst_23 [1] : vector<8x8xf32> to vector<8xf32>
    %49 = vector.shape_cast %48 : vector<8xf32> to vector<8x1xf32>
    %50 = vector.broadcast %49 : vector<8x1xf32> to vector<8x8xf32>
    %51 = arith.subf %47, %50 : vector<8x8xf32>
    %52 = math.exp %51 : vector<8x8xf32>
    %cst_24 = arith.constant dense<0.000000e+00> : vector<8xf32>
    %53 = vector.multi_reduction <add>, %52, %cst_24 [1] : vector<8x8xf32> to vector<8xf32>
    %54 = vector.shape_cast %53 : vector<8xf32> to vector<8x1xf32>
    %55 = tpu.reciprocal %54 {approx = true} : vector<8x1xf32> -> vector<8x1xf32>
    %56 = vector.broadcast %55 : vector<8x1xf32> to vector<8x8xf32>
    %57 = arith.mulf %52, %56 : vector<8x8xf32>
    %58 = arith.truncf %57 : vector<8x8xf32> to vector<8x8xbf16>
    %cst_25 = arith.constant dense<0.000000e+00> : vector<8x8xf32>
    %59 = tpu.matmul %58, %46, %cst_25 {dimension_numbers = #tpu.dot_dimension_numbers<[1], [0], [0], [1], [0, 0, 1, 1], [], []>} : vector<8x8xbf16>, vector<8x8xbf16>, vector<8x8xf32> -> vector<8x8xf32>
    %60 = arith.truncf %59 : vector<8x8xf32> to vector<8x8xbf16>
    %c0_26 = arith.constant 0 : index
    %c0_27 = arith.constant 0 : index
    %61 = vector.load %arg11[%c0_26, %c0_27] : memref<32x32xbf16, #tpu.memory_space<vmem>>, vector<8x32xbf16>
    %cst_28 = arith.constant dense<0.000000e+00> : vector<8x32xf32>
    %62 = tpu.matmul %60, %61, %cst_28 {dimension_numbers = #tpu.dot_dimension_numbers<[1], [0], [0], [1], [0, 0, 1, 1], [], []>} : vector<8x8xbf16>, vector<8x32xbf16>, vector<8x32xf32> -> vector<8x32xf32>
    %63 = arith.addf %43, %62 : vector<8x32xf32>
    %64 = vector.extract_strided_slice %42 {offsets = [0, 8], sizes = [8, 8], strides = [1, 1]} : vector<8x32xbf16> to vector<8x8xbf16>
    %c0_29 = arith.constant 0 : index
    %c8 = arith.constant 8 : index
    %65 = vector.load %arg20[%c0_29, %c8] : memref<8x32xbf16, #tpu.memory_space<vmem>>, vector<8x8xbf16>
    %c0_30 = arith.constant 0 : index
    %c8_31 = arith.constant 8 : index
    %66 = vector.load %arg21[%c0_30, %c8_31] : memref<8x32xbf16, #tpu.memory_space<vmem>>, vector<8x8xbf16>
    "tpu.trace_start"() <{level = 10 : i32, message = "qd,kd->qk"}> : () -> ()
    %cst_32 = arith.constant dense<0.000000e+00> : vector<8x8xf32>
    %67 = tpu.matmul %64, %65, %cst_32 {dimension_numbers = #tpu.dot_dimension_numbers<[1], [1], [0], [0], [0, 0, 1, 0], [], []>} : vector<8x8xbf16>, vector<8x8xbf16>, vector<8x8xf32> -> vector<8x8xf32>
    "tpu.trace_stop"() : () -> ()
    %cst_33 = arith.constant dense<0xFF800000> : vector<8xf32>
    %68 = vector.multi_reduction <maximumf>, %67, %cst_33 [1] : vector<8x8xf32> to vector<8xf32>
    %69 = vector.shape_cast %68 : vector<8xf32> to vector<8x1xf32>
    %70 = vector.broadcast %69 : vector<8x1xf32> to vector<8x8xf32>
    %71 = arith.subf %67, %70 : vector<8x8xf32>
    %72 = math.exp %71 : vector<8x8xf32>
    %cst_34 = arith.constant dense<0.000000e+00> : vector<8xf32>
    %73 = vector.multi_reduction <add>, %72, %cst_34 [1] : vector<8x8xf32> to vector<8xf32>
    %74 = vector.shape_cast %73 : vector<8xf32> to vector<8x1xf32>
    %75 = tpu.reciprocal %74 {approx = true} : vector<8x1xf32> -> vector<8x1xf32>
    %76 = vector.broadcast %75 : vector<8x1xf32> to vector<8x8xf32>
    %77 = arith.mulf %72, %76 : vector<8x8xf32>
    %78 = arith.truncf %77 : vector<8x8xf32> to vector<8x8xbf16>
    %cst_35 = arith.constant dense<0.000000e+00> : vector<8x8xf32>
    %79 = tpu.matmul %78, %66, %cst_35 {dimension_numbers = #tpu.dot_dimension_numbers<[1], [0], [0], [1], [0, 0, 1, 1], [], []>} : vector<8x8xbf16>, vector<8x8xbf16>, vector<8x8xf32> -> vector<8x8xf32>
    %80 = arith.truncf %79 : vector<8x8xf32> to vector<8x8xbf16>
    %c8_36 = arith.constant 8 : index
    %c0_37 = arith.constant 0 : index
    %81 = vector.load %arg11[%c8_36, %c0_37] : memref<32x32xbf16, #tpu.memory_space<vmem>>, vector<8x32xbf16>
    %cst_38 = arith.constant dense<0.000000e+00> : vector<8x32xf32>
    %82 = tpu.matmul %80, %81, %cst_38 {dimension_numbers = #tpu.dot_dimension_numbers<[1], [0], [0], [1], [0, 0, 1, 1], [], []>} : vector<8x8xbf16>, vector<8x32xbf16>, vector<8x32xf32> -> vector<8x32xf32>
    %83 = arith.addf %63, %82 : vector<8x32xf32>
    %84 = vector.extract_strided_slice %42 {offsets = [0, 16], sizes = [8, 8], strides = [1, 1]} : vector<8x32xbf16> to vector<8x8xbf16>
    %c0_39 = arith.constant 0 : index
    %c16 = arith.constant 16 : index
    %85 = vector.load %arg20[%c0_39, %c16] : memref<8x32xbf16, #tpu.memory_space<vmem>>, vector<8x8xbf16>
    %c0_40 = arith.constant 0 : index
    %c16_41 = arith.constant 16 : index
    %86 = vector.load %arg21[%c0_40, %c16_41] : memref<8x32xbf16, #tpu.memory_space<vmem>>, vector<8x8xbf16>
    "tpu.trace_start"() <{level = 10 : i32, message = "qd,kd->qk"}> : () -> ()
    %cst_42 = arith.constant dense<0.000000e+00> : vector<8x8xf32>
    %87 = tpu.matmul %84, %85, %cst_42 {dimension_numbers = #tpu.dot_dimension_numbers<[1], [1], [0], [0], [0, 0, 1, 0], [], []>} : vector<8x8xbf16>, vector<8x8xbf16>, vector<8x8xf32> -> vector<8x8xf32>
    "tpu.trace_stop"() : () -> ()
    %cst_43 = arith.constant dense<0xFF800000> : vector<8xf32>
    %88 = vector.multi_reduction <maximumf>, %87, %cst_43 [1] : vector<8x8xf32> to vector<8xf32>
    %89 = vector.shape_cast %88 : vector<8xf32> to vector<8x1xf32>
    %90 = vector.broadcast %89 : vector<8x1xf32> to vector<8x8xf32>
    %91 = arith.subf %87, %90 : vector<8x8xf32>
    %92 = math.exp %91 : vector<8x8xf32>
    %cst_44 = arith.constant dense<0.000000e+00> : vector<8xf32>
    %93 = vector.multi_reduction <add>, %92, %cst_44 [1] : vector<8x8xf32> to vector<8xf32>
    %94 = vector.shape_cast %93 : vector<8xf32> to vector<8x1xf32>
    %95 = tpu.reciprocal %94 {approx = true} : vector<8x1xf32> -> vector<8x1xf32>
    %96 = vector.broadcast %95 : vector<8x1xf32> to vector<8x8xf32>
    %97 = arith.mulf %92, %96 : vector<8x8xf32>
    %98 = arith.truncf %97 : vector<8x8xf32> to vector<8x8xbf16>
    %cst_45 = arith.constant dense<0.000000e+00> : vector<8x8xf32>
    %99 = tpu.matmul %98, %86, %cst_45 {dimension_numbers = #tpu.dot_dimension_numbers<[1], [0], [0], [1], [0, 0, 1, 1], [], []>} : vector<8x8xbf16>, vector<8x8xbf16>, vector<8x8xf32> -> vector<8x8xf32>
    %100 = arith.truncf %99 : vector<8x8xf32> to vector<8x8xbf16>
    %c16_46 = arith.constant 16 : index
    %c0_47 = arith.constant 0 : index
    %101 = vector.load %arg11[%c16_46, %c0_47] : memref<32x32xbf16, #tpu.memory_space<vmem>>, vector<8x32xbf16>
    %cst_48 = arith.constant dense<0.000000e+00> : vector<8x32xf32>
    %102 = tpu.matmul %100, %101, %cst_48 {dimension_numbers = #tpu.dot_dimension_numbers<[1], [0], [0], [1], [0, 0, 1, 1], [], []>} : vector<8x8xbf16>, vector<8x32xbf16>, vector<8x32xf32> -> vector<8x32xf32>
    %103 = arith.addf %83, %102 : vector<8x32xf32>
    %104 = vector.extract_strided_slice %42 {offsets = [0, 24], sizes = [8, 8], strides = [1, 1]} : vector<8x32xbf16> to vector<8x8xbf16>
    %c0_49 = arith.constant 0 : index
    %c24 = arith.constant 24 : index
    %105 = vector.load %arg20[%c0_49, %c24] : memref<8x32xbf16, #tpu.memory_space<vmem>>, vector<8x8xbf16>
    %c0_50 = arith.constant 0 : index
    %c24_51 = arith.constant 24 : index
    %106 = vector.load %arg21[%c0_50, %c24_51] : memref<8x32xbf16, #tpu.memory_space<vmem>>, vector<8x8xbf16>
    "tpu.trace_start"() <{level = 10 : i32, message = "qd,kd->qk"}> : () -> ()
    %cst_52 = arith.constant dense<0.000000e+00> : vector<8x8xf32>
    %107 = tpu.matmul %104, %105, %cst_52 {dimension_numbers = #tpu.dot_dimension_numbers<[1], [1], [0], [0], [0, 0, 1, 0], [], []>} : vector<8x8xbf16>, vector<8x8xbf16>, vector<8x8xf32> -> vector<8x8xf32>
    "tpu.trace_stop"() : () -> ()
    %cst_53 = arith.constant dense<0xFF800000> : vector<8xf32>
    %108 = vector.multi_reduction <maximumf>, %107, %cst_53 [1] : vector<8x8xf32> to vector<8xf32>
    %109 = vector.shape_cast %108 : vector<8xf32> to vector<8x1xf32>
    %110 = vector.broadcast %109 : vector<8x1xf32> to vector<8x8xf32>
    %111 = arith.subf %107, %110 : vector<8x8xf32>
    %112 = math.exp %111 : vector<8x8xf32>
    %cst_54 = arith.constant dense<0.000000e+00> : vector<8xf32>
    %113 = vector.multi_reduction <add>, %112, %cst_54 [1] : vector<8x8xf32> to vector<8xf32>
    %114 = vector.shape_cast %113 : vector<8xf32> to vector<8x1xf32>
    %115 = tpu.reciprocal %114 {approx = true} : vector<8x1xf32> -> vector<8x1xf32>
    %116 = vector.broadcast %115 : vector<8x1xf32> to vector<8x8xf32>
    %117 = arith.mulf %112, %116 : vector<8x8xf32>
    %118 = arith.truncf %117 : vector<8x8xf32> to vector<8x8xbf16>
    %cst_55 = arith.constant dense<0.000000e+00> : vector<8x8xf32>
    %119 = tpu.matmul %118, %106, %cst_55 {dimension_numbers = #tpu.dot_dimension_numbers<[1], [0], [0], [1], [0, 0, 1, 1], [], []>} : vector<8x8xbf16>, vector<8x8xbf16>, vector<8x8xf32> -> vector<8x8xf32>
    %120 = arith.truncf %119 : vector<8x8xf32> to vector<8x8xbf16>
    %c24_56 = arith.constant 24 : index
    %c0_57 = arith.constant 0 : index
    %121 = vector.load %arg11[%c24_56, %c0_57] : memref<32x32xbf16, #tpu.memory_space<vmem>>, vector<8x32xbf16>
    %cst_58 = arith.constant dense<0.000000e+00> : vector<8x32xf32>
    %122 = tpu.matmul %120, %121, %cst_58 {dimension_numbers = #tpu.dot_dimension_numbers<[1], [0], [0], [1], [0, 0, 1, 1], [], []>} : vector<8x8xbf16>, vector<8x32xbf16>, vector<8x32xf32> -> vector<8x32xf32>
    %123 = arith.addf %103, %122 : vector<8x32xf32>
    %c0_59 = arith.constant 0 : index
    %c0_60 = arith.constant 0 : index
    %124 = vector.load %arg12[%c0_59, %c0_60] : memref<1x32xf32, #tpu.memory_space<vmem>>, vector<1x32xf32>
    %125 = vector.broadcast %124 : vector<1x32xf32> to vector<8x32xf32>
    %126 = arith.addf %123, %125 : vector<8x32xf32>
    %127 = arith.addf %9, %126 : vector<8x32xf32>
    %c0_61 = arith.constant 0 : index
    %c0_62 = arith.constant 0 : index
    %128 = vector.load %arg13[%c0_61, %c0_62] : memref<1x32xf32, #tpu.memory_space<vmem>>, vector<1x32xf32>
    %c0_63 = arith.constant 0 : index
    %c0_64 = arith.constant 0 : index
    %129 = vector.load %arg14[%c0_63, %c0_64] : memref<1x32xf32, #tpu.memory_space<vmem>>, vector<1x32xf32>
    %cst_65 = arith.constant dense<0.000000e+00> : vector<8xf32>
    %130 = vector.multi_reduction <add>, %127, %cst_65 [1] : vector<8x32xf32> to vector<8xf32>
    %131 = vector.shape_cast %130 : vector<8xf32> to vector<8x1xf32>
    %cst_66 = arith.constant 3.200000e+01 : f32
    %132 = vector.broadcast %cst_66 : f32 to vector<8x1xf32>
    %133 = arith.divf %131, %132 : vector<8x1xf32>
    %134 = arith.mulf %127, %127 : vector<8x32xf32>
    %cst_67 = arith.constant dense<0.000000e+00> : vector<8xf32>
    %135 = vector.multi_reduction <add>, %134, %cst_67 [1] : vector<8x32xf32> to vector<8xf32>
    %136 = vector.shape_cast %135 : vector<8xf32> to vector<8x1xf32>
    %cst_68 = arith.constant 3.200000e+01 : f32
    %137 = vector.broadcast %cst_68 : f32 to vector<8x1xf32>
    %138 = arith.divf %136, %137 : vector<8x1xf32>
    %139 = arith.mulf %133, %133 : vector<8x1xf32>
    %140 = arith.subf %138, %139 : vector<8x1xf32>
    %cst_69 = arith.constant 0.000000e+00 : f32
    %141 = vector.broadcast %cst_69 : f32 to vector<8x1xf32>
    %142 = arith.maximumf %140, %141 : vector<8x1xf32>
    %143 = vector.broadcast %133 : vector<8x1xf32> to vector<8x32xf32>
    %144 = arith.subf %127, %143 : vector<8x32xf32>
    %cst_70 = arith.constant 9.99999974E-6 : f32
    %145 = vector.broadcast %cst_70 : f32 to vector<8x1xf32>
    %146 = arith.addf %142, %145 : vector<8x1xf32>
    %147 = math.rsqrt %146 : vector<8x1xf32>
    %148 = vector.broadcast %147 : vector<8x1xf32> to vector<8x32xf32>
    %149 = arith.mulf %144, %148 : vector<8x32xf32>
    %150 = vector.broadcast %128 : vector<1x32xf32> to vector<8x32xf32>
    %151 = arith.mulf %149, %150 : vector<8x32xf32>
    %152 = vector.broadcast %129 : vector<1x32xf32> to vector<8x32xf32>
    %153 = arith.addf %151, %152 : vector<8x32xf32>
    %154 = arith.truncf %153 : vector<8x32xf32> to vector<8x32xbf16>
    %c0_71 = arith.constant 0 : index
    %c0_72 = arith.constant 0 : index
    %155 = vector.load %arg15[%c0_71, %c0_72] : memref<32x64xbf16, #tpu.memory_space<vmem>>, vector<32x64xbf16>
    %cst_73 = arith.constant dense<0.000000e+00> : vector<8x64xf32>
    %156 = tpu.matmul %154, %155, %cst_73 {dimension_numbers = #tpu.dot_dimension_numbers<[1], [0], [0], [1], [0, 0, 1, 1], [], []>} : vector<8x32xbf16>, vector<32x64xbf16>, vector<8x64xf32> -> vector<8x64xf32>
    %c0_74 = arith.constant 0 : index
    %c0_75 = arith.constant 0 : index
    %157 = vector.load %arg16[%c0_74, %c0_75] : memref<1x64xf32, #tpu.memory_space<vmem>>, vector<1x64xf32>
    %158 = vector.broadcast %157 : vector<1x64xf32> to vector<8x64xf32>
    %159 = arith.addf %156, %158 : vector<8x64xf32>
    %cst_76 = arith.constant 5.000000e-01 : f32
    %160 = vector.broadcast %cst_76 : f32 to vector<8x64xf32>
    %161 = arith.mulf %160, %159 : vector<8x64xf32>
    %cst_77 = arith.constant 0.707106769 : f32
    %162 = vector.broadcast %cst_77 : f32 to vector<8x64xf32>
    %163 = arith.mulf %159, %162 : vector<8x64xf32>
    %164 = math.erf %163 : vector<8x64xf32>
    %cst_78 = arith.constant 1.000000e+00 : f32
    %165 = vector.broadcast %cst_78 : f32 to vector<8x64xf32>
    %166 = arith.addf %165, %164 : vector<8x64xf32>
    %167 = arith.mulf %161, %166 : vector<8x64xf32>
    %168 = arith.truncf %167 : vector<8x64xf32> to vector<8x64xbf16>
    %c0_79 = arith.constant 0 : index
    %c0_80 = arith.constant 0 : index
    %169 = vector.load %arg17[%c0_79, %c0_80] : memref<64x32xbf16, #tpu.memory_space<vmem>>, vector<64x32xbf16>
    %cst_81 = arith.constant dense<0.000000e+00> : vector<8x32xf32>
    %170 = tpu.matmul %168, %169, %cst_81 {dimension_numbers = #tpu.dot_dimension_numbers<[1], [0], [0], [1], [0, 0, 1, 1], [], []>} : vector<8x64xbf16>, vector<64x32xbf16>, vector<8x32xf32> -> vector<8x32xf32>
    %c0_82 = arith.constant 0 : index
    %c0_83 = arith.constant 0 : index
    %171 = vector.load %arg18[%c0_82, %c0_83] : memref<1x32xf32, #tpu.memory_space<vmem>>, vector<1x32xf32>
    %172 = vector.broadcast %171 : vector<1x32xf32> to vector<8x32xf32>
    %173 = arith.addf %170, %172 : vector<8x32xf32>
    %174 = arith.addf %127, %173 : vector<8x32xf32>
    %c0_84 = arith.constant 0 : index
    %c0_85 = arith.constant 0 : index
    %c0_86 = arith.constant 0 : index
    %175 = vector.load %arg19[%c0_84, %c0_85, %c0_86] : memref<1x8x32xf32, #tpu.memory_space<vmem>>, vector<1x8x32xf32>
    %176 = vector.shape_cast %175 : vector<1x8x32xf32> to vector<8x32xf32>
    %177 = vector.shape_cast %174 : vector<8x32xf32> to vector<1x8x32xf32>
    tpu.vector_store %arg19[%c0_84, %c0_85, %c0_86], %177 {strides = array<i32>} : memref<1x8x32xf32, #tpu.memory_space<vmem>>, vector<1x8x32xf32>,
    return
  }
  func.func @transform_0(%arg0: i32, %arg1: i32) -> (i32, i32, i32) {
    %c0_i32 = arith.constant 0 : i32
    %c0_i32_0 = arith.constant 0 : i32
    %c0_i32_1 = arith.constant 0 : i32
    return %arg0, %c0_i32, %c0_i32_0 : i32, i32, i32
  }
  func.func @transform_1(%arg0: i32, %arg1: i32) -> (i32, i32) {
    %c0_i32 = arith.constant 0 : i32
    %c0_i32_0 = arith.constant 0 : i32
    %c0_i32_1 = arith.constant 0 : i32
    return %c0_i32, %c0_i32_0 : i32, i32
  }
  func.func @transform_2(%arg0: i32, %arg1: i32) -> (i32, i32) {
    %c0_i32 = arith.constant 0 : i32
    %c0_i32_0 = arith.constant 0 : i32
    %c0_i32_1 = arith.constant 0 : i32
    return %c0_i32, %c0_i32_0 : i32, i32
  }
  func.func @transform_3(%arg0: i32, %arg1: i32) -> (i32, i32) {
    %c0_i32 = arith.constant 0 : i32
    %c0_i32_0 = arith.constant 0 : i32
    %c0_i32_1 = arith.constant 0 : i32
    return %c0_i32, %c0_i32_0 : i32, i32
  }
  func.func @transform_4(%arg0: i32, %arg1: i32) -> (i32, i32) {
    %c0_i32 = arith.constant 0 : i32
    %c0_i32_0 = arith.constant 0 : i32
    %c0_i32_1 = arith.constant 0 : i32
    return %c0_i32, %c0_i32_0 : i32, i32
  }
  func.func @transform_5(%arg0: i32, %arg1: i32) -> (i32, i32) {
    %c0_i32 = arith.constant 0 : i32
    %c0_i32_0 = arith.constant 0 : i32
    %c0_i32_1 = arith.constant 0 : i32
    return %c0_i32, %c0_i32_0 : i32, i32
  }
  func.func @transform_6(%arg0: i32, %arg1: i32) -> (i32, i32) {
    %c0_i32 = arith.constant 0 : i32
    %c0_i32_0 = arith.constant 0 : i32
    %c0_i32_1 = arith.constant 0 : i32
    return %c0_i32, %c0_i32_0 : i32, i32
  }
  func.func @transform_7(%arg0: i32, %arg1: i32) -> (i32, i32) {
    %c0_i32 = arith.constant 0 : i32
    %c0_i32_0 = arith.constant 0 : i32
    %c0_i32_1 = arith.constant 0 : i32
    return %c0_i32, %c0_i32_0 : i32, i32
  }
  func.func @transform_8(%arg0: i32, %arg1: i32) -> (i32, i32) {
    %c0_i32 = arith.constant 0 : i32
    %c0_i32_0 = arith.constant 0 : i32
    %c0_i32_1 = arith.constant 0 : i32
    return %c0_i32, %c0_i32_0 : i32, i32
  }
  func.func @transform_9(%arg0: i32, %arg1: i32) -> (i32, i32) {
    %c0_i32 = arith.constant 0 : i32
    %c0_i32_0 = arith.constant 0 : i32
    %c0_i32_1 = arith.constant 0 : i32
    return %c0_i32, %c0_i32_0 : i32, i32
  }
  func.func @transform_10(%arg0: i32, %arg1: i32) -> (i32, i32) {
    %c0_i32 = arith.constant 0 : i32
    %c0_i32_0 = arith.constant 0 : i32
    %c0_i32_1 = arith.constant 0 : i32
    return %c0_i32, %c0_i32_0 : i32, i32
  }
  func.func @transform_11(%arg0: i32, %arg1: i32) -> (i32, i32) {
    %c0_i32 = arith.constant 0 : i32
    %c0_i32_0 = arith.constant 0 : i32
    %c0_i32_1 = arith.constant 0 : i32
    return %c0_i32, %c0_i32_0 : i32, i32
  }
  func.func @transform_12(%arg0: i32, %arg1: i32) -> (i32, i32) {
    %c0_i32 = arith.constant 0 : i32
    %c0_i32_0 = arith.constant 0 : i32
    %c0_i32_1 = arith.constant 0 : i32
    return %c0_i32, %c0_i32_0 : i32, i32
  }
  func.func @transform_13(%arg0: i32, %arg1: i32) -> (i32, i32) {
    %c0_i32 = arith.constant 0 : i32
    %c0_i32_0 = arith.constant 0 : i32
    %c0_i32_1 = arith.constant 0 : i32
    return %c0_i32, %c0_i32_0 : i32, i32
  }
  func.func @transform_14(%arg0: i32, %arg1: i32) -> (i32, i32) {
    %c0_i32 = arith.constant 0 : i32
    %c0_i32_0 = arith.constant 0 : i32
    %c0_i32_1 = arith.constant 0 : i32
    return %c0_i32, %c0_i32_0 : i32, i32
  }
  func.func @transform_15(%arg0: i32, %arg1: i32) -> (i32, i32) {
    %c0_i32 = arith.constant 0 : i32
    %c0_i32_0 = arith.constant 0 : i32
    %c0_i32_1 = arith.constant 0 : i32
    return %c0_i32, %c0_i32_0 : i32, i32
  }
  func.func @transform_16(%arg0: i32, %arg1: i32) -> (i32, i32) {
    %c0_i32 = arith.constant 0 : i32
    %c0_i32_0 = arith.constant 0 : i32
    %c0_i32_1 = arith.constant 0 : i32
    return %c0_i32, %c0_i32_0 : i32, i32
  }
  func.func @transform_17(%arg0: i32, %arg1: i32) -> (i32, i32, i32) {
    %c0_i32 = arith.constant 0 : i32
    %c0_i32_0 = arith.constant 0 : i32
    return %arg0, %arg1, %c0_i32 : i32, i32, i32
  }
}

</mosaic_0001>

<llo_original>
// kernel: tpu_custom_call.1
$region0: #{tpu_custom_call.1}
  #allocation0 [shape = 'u32[]', space=smem, size = 0x4, offset = 0x4, fixed_abs, tag = 'smem constant byte address 0x4 - core index']
  #allocation1 [shape = 'u32[72,128]{1,0:T(1,128)}', space=vmem, size = 0x9000, scoped, tag = 'internal scratch']
  #allocation2 [shape = 'bf16[8,32]{1,0:T(8,128)(2,1)}', space=vmem, size = 0x800, scoped, tag = 'scratch operand']
  #allocation3 [shape = 'bf16[8,32]{1,0:T(8,128)(2,1)}', space=vmem, size = 0x800, scoped, tag = 'scratch operand']
  %s0 = inlined_call_operand.vmem [shape: f32[2,8,32], index: 0, kind: input, shape index: {}]
  %s1 = inlined_call_operand.hbm [shape: f32[1,32], index: 1, kind: input, shape index: {}]
  %s2 = inlined_call_operand.vmem [shape: f32[1,32], index: 2, kind: input, shape index: {}]
  %s3 = inlined_call_operand.vmem [shape: bf16[32,32], index: 3, kind: input, shape index: {}]
  %s4 = inlined_call_operand.vmem [shape: f32[1,32], index: 4, kind: input, shape index: {}]
  %s5 = inlined_call_operand.vmem [shape: bf16[32,32], index: 5, kind: input, shape index: {}]
  %s6 = inlined_call_operand.vmem [shape: f32[1,32], index: 6, kind: input, shape index: {}]
  %s7 = inlined_call_operand.hbm [shape: bf16[32,32], index: 7, kind: input, shape index: {}]
  %s8 = inlined_call_operand.vmem [shape: f32[1,32], index: 8, kind: input, shape index: {}]
  %s9 = inlined_call_operand.hbm [shape: bf16[32,32], index: 9, kind: input, shape index: {}]
  %s10 = inlined_call_operand.vmem [shape: f32[1,32], index: 10, kind: input, shape index: {}]
  %s11 = inlined_call_operand.vmem [shape: f32[1,32], index: 11, kind: input, shape index: {}]
  %s12 = inlined_call_operand.vmem [shape: f32[1,32], index: 12, kind: input, shape index: {}]
  %s13 = inlined_call_operand.hbm [shape: bf16[32,64], index: 13, kind: input, shape index: {}]
  %s14 = inlined_call_operand.vmem [shape: f32[1,64], index: 14, kind: input, shape index: {}]
  %s15 = inlined_call_operand.vmem [shape: bf16[64,32], index: 15, kind: input, shape index: {}]
  %s16 = inlined_call_operand.vmem [shape: f32[1,32], index: 16, kind: input, shape index: {}]
  %s17 = inlined_call_operand.hbm [shape: f32[2,8,32], index: 17, kind: output, shape index: {}]
  %s18 = sld [smem:[#allocation0]]
  $region121: #{tpu_custom_call.1} parent=0
    _
  %s20 = ssub.s32 1, %s18
  %s21 = scalar_select 0, %s20, %s18
  $region1: #{tpu_custom_call.1} parent=0
    #allocation4 [shape = 'u8[512]{0}', space=vmem, size = 0x400, scoped, tag = 'input window, operand 1, single buffered']
    #allocation5 [shape = 's32[2]{0}', space=sflag, size = 0x8, scoped, tag = 'scoped memory for tpu_custom_call.1']
    #allocation6 [shape = 's32[2]{0}', space=sflag, size = 0x8, scoped, tag = 'scoped memory for tpu_custom_call.1']
    #allocation7 [shape = 'u8[8192]{0}', space=vmem, size = 0x2000, scoped, tag = 'input window, operand 7, single buffered']
    #allocation8 [shape = 's32[1]{0}', space=sflag, size = 0x4, scoped, tag = 'scoped memory for tpu_custom_call.1']
    #allocation9 [shape = 'u8[8192]{0}', space=vmem, size = 0x2000, scoped, tag = 'input window, operand 9, single buffered']
    #allocation10 [shape = 'u8[8192]{0}', space=vmem, size = 0x2000, scoped, tag = 'input window, operand 13, single buffered']
    #allocation11 [shape = 's32[1]{0}', space=sflag, size = 0x4, scoped, tag = 'scoped memory for tpu_custom_call.1']
    #allocation12 [shape = 'u8[8192]{0}', space=vmem, size = 0x2000, scoped, tag = 'output window, operand 0']
    %22 = vsyncpa [#allocation5], 0
    %23 = vsyncpa [#allocation8], 0
    %24 = vsyncpa [#allocation11], 0
    %25 = vsyncpa [#allocation6], 0
    %s26 = scalar_lea.sflag [#allocation6], 1
    %27 = vsyncpa %s26, 0
    loop: start=0, step=1, limit=4
    $region2: #{tpu_custom_call.1} parent=1 // loop_pre_header
      _
    $region3: #{tpu_custom_call.1} parent=1 // loop_header
      %s29 = sphi 0, %s33
      %p30 = scmp.ge.s32.totalorder %s29, 4
      %s36 = sphi 0, %s48
      %s37 = sphi 0, %s44
      %s38 = sphi 0, %s36
      %s39 = sphi 0, %s37
      %s40 = sphi 0, %s38
      %s41 = sphi 0, %s39
      %s51 = sphi 0, %s53
      %s54 = sphi 0, %s51
      %s55 = sphi 0, %s54
      %s71 = sphi 0, %s55
      %s75 = sphi 0, %s75
      %s77 = sphi 0, %s75
      %s78 = sphi 0, %s77
      %s92 = sphi 0, %s78
      %s96 = sphi 0, %s96
      %s98 = sphi 0, %s96
      %s99 = sphi 0, %s98
      %s113 = sphi 0, %s99
      %s117 = sphi 0, %s117
      %s119 = sphi 0, %s117
      %s120 = sphi 0, %s119
      %s134 = sphi 0, %s120
      %s138 = sphi 0, %s138
      %s140 = sphi 0, %s138
      %s141 = sphi 0, %s140
      %s155 = sphi 0, %s141
      %s159 = sphi 0, %s159
      %s161 = sphi 0, %s159
      %s162 = sphi 0, %s161
      %s176 = sphi 0, %s162
      %s180 = sphi 0, %s180
      %s182 = sphi 0, %s180
      %s183 = sphi 0, %s182
      %s197 = sphi 0, %s183
      %s201 = sphi 0, %s201
      %s203 = sphi 0, %s201
      %s204 = sphi 0, %s203
      %s218 = sphi 0, %s204
      %s222 = sphi 0, %s222
      %s224 = sphi 0, %s222
      %s225 = sphi 0, %s224
      %s239 = sphi 0, %s225
      %s243 = sphi 0, %s243
      %s245 = sphi 0, %s243
      %s246 = sphi 0, %s245
      %s260 = sphi 0, %s246
      %s264 = sphi 0, %s264
      %s266 = sphi 0, %s264
      %s267 = sphi 0, %s266
      %s281 = sphi 0, %s267
      %s285 = sphi 0, %s285
      %s287 = sphi 0, %s285
      %s288 = sphi 0, %s287
      %s302 = sphi 0, %s288
      %s306 = sphi 0, %s306
      %s308 = sphi 0, %s306
      %s309 = sphi 0, %s308
      %s323 = sphi 0, %s309
      %s327 = sphi 0, %s327
      %s329 = sphi 0, %s327
      %s330 = sphi 0, %s329
      %s344 = sphi 0, %s330
      %s348 = sphi 0, %s348
      %s350 = sphi 0, %s348
      %s351 = sphi 0, %s350
      %s365 = sphi 0, %s351
      %s369 = sphi 0, %s369
      %s371 = sphi 0, %s369
      %s372 = sphi 0, %s371
      %s386 = sphi 0, %s372
      %s390 = sphi 0, %s390
      %s392 = sphi 0, %s390
      %s393 = sphi 0, %s392
      %s407 = sphi 0, %s393
      %s415 = sphi 0, %s417
      %s418 = sphi 0, %s415
      %s419 = sphi 0, %s418
      %s435 = sphi 0, %s419
    $region4: #{tpu_custom_call.1} parent=1 // loop_header_branch
      %32 = sbr.rel (%p30) target = $region8
    $region5: #{tpu_custom_call.1} parent=1 // loop_body
      %s34 = ssub.s32 %s29, 1
      %s35 = ssub.s32 %s29, 2
      %s42 = sadd.s32 1, %s37
      %p43 = scmp.ge.s32.totalorder %s42, 1
      %s44 = scalar_select %p43, 0, %s42
      %s45 = sadd.s32 1, %s36
      %s46 = scalar_select %p43, %s45, %s36
      %p47 = scmp.ge.s32.totalorder %s46, 2
      %s48 = scalar_select %p47, 0, %s46
      %s49 = ssub.s32 %s36, %s48
      %p50 = scmp.eq.s32.totalorder %s49, 0
      %s52 = sadd.s32 %s51, 1
      %s53 = scalar_select %p50, %s51, %s52
      %p56 = pneg %p50
      %p57 = scmp.eq.s32.totalorder %s29, 1
      %p58 = por %p56, %p57
      %p59 = scmp.ne.s32.totalorder %s51, %s54
      %p60 = scmp.eq.s32.totalorder %s29, 0
      %p61 = por %p59, %p60
      %p62 = scmp.ne.s32.totalorder %s51, %s54
      %p63 = scmp.eq.s32.totalorder %s34, 1
      %p64 = por %p62, %p63
      %p65 = scmp.ne.s32.totalorder %s54, %s55
      %p66 = scmp.eq.s32.totalorder %s34, 0
      %p67 = por %p65, %p66
      %p68 = scmp.ne.s32.totalorder %s54, %s55
      %p69 = scmp.eq.s32.totalorder %s35, 1
      %p70 = por %p68, %p69
      %p72 = scmp.ne.s32.totalorder %s55, %s71
      %p73 = scmp.eq.s32.totalorder %s35, 0
      %p74 = por %p72, %p73
      %s76 = sadd.s32 %s75, 1
      %p79 = scmp.eq.s32.totalorder %s29, 1
      %p80 = scmp.ne.s32.totalorder %s75, %s77
      %p81 = scmp.eq.s32.totalorder %s29, 0
      %p82 = por %p80, %p81
      %p83 = scmp.ne.s32.totalorder %s75, %s77
      %p84 = scmp.eq.s32.totalorder %s34, 1
      %p85 = por %p83, %p84
      %p86 = scmp.ne.s32.totalorder %s77, %s78
      %p87 = scmp.eq.s32.totalorder %s34, 0
      %p88 = por %p86, %p87
      %p89 = scmp.ne.s32.totalorder %s77, %s78
      %p90 = scmp.eq.s32.totalorder %s35, 1
      %p91 = por %p89, %p90
      %p93 = scmp.ne.s32.totalorder %s78, %s92
      %p94 = scmp.eq.s32.totalorder %s35, 0
      %p95 = por %p93, %p94
      %s97 = sadd.s32 %s96, 1
      %p100 = scmp.eq.s32.totalorder %s29, 1
      %p101 = scmp.ne.s32.totalorder %s96, %s98
      %p102 = scmp.eq.s32.totalorder %s29, 0
      %p103 = por %p101, %p102
      %p104 = scmp.ne.s32.totalorder %s96, %s98
      %p105 = scmp.eq.s32.totalorder %s34, 1
      %p106 = por %p104, %p105
      %p107 = scmp.ne.s32.totalorder %s98, %s99
      %p108 = scmp.eq.s32.totalorder %s34, 0
      %p109 = por %p107, %p108
      %p110 = scmp.ne.s32.totalorder %s98, %s99
      %p111 = scmp.eq.s32.totalorder %s35, 1
      %p112 = por %p110, %p111
      %p114 = scmp.ne.s32.totalorder %s99, %s113
      %p115 = scmp.eq.s32.totalorder %s35, 0
      %p116 = por %p114, %p115
      %s118 = sadd.s32 %s117, 1
      %p121 = scmp.eq.s32.totalorder %s29, 1
      %p122 = scmp.ne.s32.totalorder %s117, %s119
      %p123 = scmp.eq.s32.totalorder %s29, 0
      %p124 = por %p122, %p123
      %p125 = scmp.ne.s32.totalorder %s117, %s119
      %p126 = scmp.eq.s32.totalorder %s34, 1
      %p127 = por %p125, %p126
      %p128 = scmp.ne.s32.totalorder %s119, %s120
      %p129 = scmp.eq.s32.totalorder %s34, 0
      %p130 = por %p128, %p129
      %p131 = scmp.ne.s32.totalorder %s119, %s120
      %p132 = scmp.eq.s32.totalorder %s35, 1
      %p133 = por %p131, %p132
      %p135 = scmp.ne.s32.totalorder %s120, %s134
      %p136 = scmp.eq.s32.totalorder %s35, 0
      %p137 = por %p135, %p136
      %s139 = sadd.s32 %s138, 1
      %p142 = scmp.eq.s32.totalorder %s29, 1
      %p143 = scmp.ne.s32.totalorder %s138, %s140
      %p144 = scmp.eq.s32.totalorder %s29, 0
      %p145 = por %p143, %p144
      %p146 = scmp.ne.s32.totalorder %s138, %s140
      %p147 = scmp.eq.s32.totalorder %s34, 1
      %p148 = por %p146, %p147
      %p149 = scmp.ne.s32.totalorder %s140, %s141
      %p150 = scmp.eq.s32.totalorder %s34, 0
      %p151 = por %p149, %p150
      %p152 = scmp.ne.s32.totalorder %s140, %s141
      %p153 = scmp.eq.s32.totalorder %s35, 1
      %p154 = por %p152, %p153
      %p156 = scmp.ne.s32.totalorder %s141, %s155
      %p157 = scmp.eq.s32.totalorder %s35, 0
      %p158 = por %p156, %p157
      %s160 = sadd.s32 %s159, 1
      %p163 = scmp.eq.s32.totalorder %s29, 1
      %p164 = scmp.ne.s32.totalorder %s159, %s161
      %p165 = scmp.eq.s32.totalorder %s29, 0
      %p166 = por %p164, %p165
      %p167 = scmp.ne.s32.totalorder %s159, %s161
      %p168 = scmp.eq.s32.totalorder %s34, 1
      %p169 = por %p167, %p168
      %p170 = scmp.ne.s32.totalorder %s161, %s162
      %p171 = scmp.eq.s32.totalorder %s34, 0
      %p172 = por %p170, %p171
      %p173 = scmp.ne.s32.totalorder %s161, %s162
      %p174 = scmp.eq.s32.totalorder %s35, 1
      %p175 = por %p173, %p174
      %p177 = scmp.ne.s32.totalorder %s162, %s176
      %p178 = scmp.eq.s32.totalorder %s35, 0
      %p179 = por %p177, %p178
      %s181 = sadd.s32 %s180, 1
      %p184 = scmp.eq.s32.totalorder %s29, 1
      %p185 = scmp.ne.s32.totalorder %s180, %s182
      %p186 = scmp.eq.s32.totalorder %s29, 0
      %p187 = por %p185, %p186
      %p188 = scmp.ne.s32.totalorder %s180, %s182
      %p189 = scmp.eq.s32.totalorder %s34, 1
      %p190 = por %p188, %p189
      %p191 = scmp.ne.s32.totalorder %s182, %s183
      %p192 = scmp.eq.s32.totalorder %s34, 0
      %p193 = por %p191, %p192
      %p194 = scmp.ne.s32.totalorder %s182, %s183
      %p195 = scmp.eq.s32.totalorder %s35, 1
      %p196 = por %p194, %p195
      %p198 = scmp.ne.s32.totalorder %s183, %s197
      %p199 = scmp.eq.s32.totalorder %s35, 0
      %p200 = por %p198, %p199
      %s202 = sadd.s32 %s201, 1
      %p205 = scmp.eq.s32.totalorder %s29, 1
      %p206 = scmp.ne.s32.totalorder %s201, %s203
      %p207 = scmp.eq.s32.totalorder %s29, 0
      %p208 = por %p206, %p207
      %p209 = scmp.ne.s32.totalorder %s201, %s203
      %p210 = scmp.eq.s32.totalorder %s34, 1
      %p211 = por %p209, %p210
      %p212 = scmp.ne.s32.totalorder %s203, %s204
      %p213 = scmp.eq.s32.totalorder %s34, 0
      %p214 = por %p212, %p213
      %p215 = scmp.ne.s32.totalorder %s203, %s204
      %p216 = scmp.eq.s32.totalorder %s35, 1
      %p217 = por %p215, %p216
      %p219 = scmp.ne.s32.totalorder %s204, %s218
      %p220 = scmp.eq.s32.totalorder %s35, 0
      %p221 = por %p219, %p220
      %s223 = sadd.s32 %s222, 1
      %p226 = scmp.eq.s32.totalorder %s29, 1
      %p227 = scmp.ne.s32.totalorder %s222, %s224
      %p228 = scmp.eq.s32.totalorder %s29, 0
      %p229 = por %p227, %p228
      %p230 = scmp.ne.s32.totalorder %s222, %s224
      %p231 = scmp.eq.s32.totalorder %s34, 1
      %p232 = por %p230, %p231
      %p233 = scmp.ne.s32.totalorder %s224, %s225
      %p234 = scmp.eq.s32.totalorder %s34, 0
      %p235 = por %p233, %p234
      %p236 = scmp.ne.s32.totalorder %s224, %s225
      %p237 = scmp.eq.s32.totalorder %s35, 1
      %p238 = por %p236, %p237
      %p240 = scmp.ne.s32.totalorder %s225, %s239
      %p241 = scmp.eq.s32.totalorder %s35, 0
      %p242 = por %p240, %p241
      %s244 = sadd.s32 %s243, 1
      %p247 = scmp.eq.s32.totalorder %s29, 1
      %p248 = scmp.ne.s32.totalorder %s243, %s245
      %p249 = scmp.eq.s32.totalorder %s29, 0
      %p250 = por %p248, %p249
      %p251 = scmp.ne.s32.totalorder %s243, %s245
      %p252 = scmp.eq.s32.totalorder %s34, 1
      %p253 = por %p251, %p252
      %p254 = scmp.ne.s32.totalorder %s245, %s246
      %p255 = scmp.eq.s32.totalorder %s34, 0
      %p256 = por %p254, %p255
      %p257 = scmp.ne.s32.totalorder %s245, %s246
      %p258 = scmp.eq.s32.totalorder %s35, 1
      %p259 = por %p257, %p258
      %p261 = scmp.ne.s32.totalorder %s246, %s260
      %p262 = scmp.eq.s32.totalorder %s35, 0
      %p263 = por %p261, %p262
      %s265 = sadd.s32 %s264, 1
      %p268 = scmp.eq.s32.totalorder %s29, 1
      %p269 = scmp.ne.s32.totalorder %s264, %s266
      %p270 = scmp.eq.s32.totalorder %s29, 0
      %p271 = por %p269, %p270
      %p272 = scmp.ne.s32.totalorder %s264, %s266
      %p273 = scmp.eq.s32.totalorder %s34, 1
      %p274 = por %p272, %p273
      %p275 = scmp.ne.s32.totalorder %s266, %s267
      %p276 = scmp.eq.s32.totalorder %s34, 0
      %p277 = por %p275, %p276
      %p278 = scmp.ne.s32.totalorder %s266, %s267
      %p279 = scmp.eq.s32.totalorder %s35, 1
      %p280 = por %p278, %p279
      %p282 = scmp.ne.s32.totalorder %s267, %s281
      %p283 = scmp.eq.s32.totalorder %s35, 0
      %p284 = por %p282, %p283
      %s286 = sadd.s32 %s285, 1
      %p289 = scmp.eq.s32.totalorder %s29, 1
      %p290 = scmp.ne.s32.totalorder %s285, %s287
      %p291 = scmp.eq.s32.totalorder %s29, 0
      %p292 = por %p290, %p291
      %p293 = scmp.ne.s32.totalorder %s285, %s287
      %p294 = scmp.eq.s32.totalorder %s34, 1
      %p295 = por %p293, %p294
      %p296 = scmp.ne.s32.totalorder %s287, %s288
      %p297 = scmp.eq.s32.totalorder %s34, 0
      %p298 = por %p296, %p297
      %p299 = scmp.ne.s32.totalorder %s287, %s288
      %p300 = scmp.eq.s32.totalorder %s35, 1
      %p301 = por %p299, %p300
      %p303 = scmp.ne.s32.totalorder %s288, %s302
      %p304 = scmp.eq.s32.totalorder %s35, 0
      %p305 = por %p303, %p304
      %s307 = sadd.s32 %s306, 1
      %p310 = scmp.eq.s32.totalorder %s29, 1
      %p311 = scmp.ne.s32.totalorder %s306, %s308
      %p312 = scmp.eq.s32.totalorder %s29, 0
      %p313 = por %p311, %p312
      %p314 = scmp.ne.s32.totalorder %s306, %s308
      %p315 = scmp.eq.s32.totalorder %s34, 1
      %p316 = por %p314, %p315
      %p317 = scmp.ne.s32.totalorder %s308, %s309
      %p318 = scmp.eq.s32.totalorder %s34, 0
      %p319 = por %p317, %p318
      %p320 = scmp.ne.s32.totalorder %s308, %s309
      %p321 = scmp.eq.s32.totalorder %s35, 1
      %p322 = por %p320, %p321
      %p324 = scmp.ne.s32.totalorder %s309, %s323
      %p325 = scmp.eq.s32.totalorder %s35, 0
      %p326 = por %p324, %p325
      %s328 = sadd.s32 %s327, 1
      %p331 = scmp.eq.s32.totalorder %s29, 1
      %p332 = scmp.ne.s32.totalorder %s327, %s329
      %p333 = scmp.eq.s32.totalorder %s29, 0
      %p334 = por %p332, %p333
      %p335 = scmp.ne.s32.totalorder %s327, %s329
      %p336 = scmp.eq.s32.totalorder %s34, 1
      %p337 = por %p335, %p336
      %p338 = scmp.ne.s32.totalorder %s329, %s330
      %p339 = scmp.eq.s32.totalorder %s34, 0
      %p340 = por %p338, %p339
      %p341 = scmp.ne.s32.totalorder %s329, %s330
      %p342 = scmp.eq.s32.totalorder %s35, 1
      %p343 = por %p341, %p342
      %p345 = scmp.ne.s32.totalorder %s330, %s344
      %p346 = scmp.eq.s32.totalorder %s35, 0
      %p347 = por %p345, %p346
      %s349 = sadd.s32 %s348, 1
      %p352 = scmp.eq.s32.totalorder %s29, 1
      %p353 = scmp.ne.s32.totalorder %s348, %s350
      %p354 = scmp.eq.s32.totalorder %s29, 0
      %p355 = por %p353, %p354
      %p356 = scmp.ne.s32.totalorder %s348, %s350
      %p357 = scmp.eq.s32.totalorder %s34, 1
      %p358 = por %p356, %p357
      %p359 = scmp.ne.s32.totalorder %s350, %s351
      %p360 = scmp.eq.s32.totalorder %s34, 0
      %p361 = por %p359, %p360
      %p362 = scmp.ne.s32.totalorder %s350, %s351
      %p363 = scmp.eq.s32.totalorder %s35, 1
      %p364 = por %p362, %p363
      %p366 = scmp.ne.s32.totalorder %s351, %s365
      %p367 = scmp.eq.s32.totalorder %s35, 0
      %p368 = por %p366, %p367
      %s370 = sadd.s32 %s369, 1
      %p373 = scmp.eq.s32.totalorder %s29, 1
      %p374 = scmp.ne.s32.totalorder %s369, %s371
      %p375 = scmp.eq.s32.totalorder %s29, 0
      %p376 = por %p374, %p375
      %p377 = scmp.ne.s32.totalorder %s369, %s371
      %p378 = scmp.eq.s32.totalorder %s34, 1
      %p379 = por %p377, %p378
      %p380 = scmp.ne.s32.totalorder %s371, %s372
      %p381 = scmp.eq.s32.totalorder %s34, 0
      %p382 = por %p380, %p381
      %p383 = scmp.ne.s32.totalorder %s371, %s372
      %p384 = scmp.eq.s32.totalorder %s35, 1
      %p385 = por %p383, %p384
      %p387 = scmp.ne.s32.totalorder %s372, %s386
      %p388 = scmp.eq.s32.totalorder %s35, 0
      %p389 = por %p387, %p388
      %s391 = sadd.s32 %s390, 1
      %p394 = scmp.eq.s32.totalorder %s29, 1
      %p395 = scmp.ne.s32.totalorder %s390, %s392
      %p396 = scmp.eq.s32.totalorder %s29, 0
      %p397 = por %p395, %p396
      %p398 = scmp.ne.s32.totalorder %s390, %s392
      %p399 = scmp.eq.s32.totalorder %s34, 1
      %p400 = por %p398, %p399
      %p401 = scmp.ne.s32.totalorder %s392, %s393
      %p402 = scmp.eq.s32.totalorder %s34, 0
      %p403 = por %p401, %p402
      %p404 = scmp.ne.s32.totalorder %s392, %s393
      %p405 = scmp.eq.s32.totalorder %s35, 1
      %p406 = por %p404, %p405
      %p408 = scmp.ne.s32.totalorder %s393, %s407
      %p409 = scmp.eq.s32.totalorder %s35, 0
      %p410 = por %p408, %p409
      %s411 = ssub.s32 %s36, %s48
      %s412 = ssub.s32 %s37, %s44
      %s413 = sor.u32 %s411, %s412
      %p414 = scmp.eq.s32.totalorder %s413, 0
      %s416 = sadd.s32 %s415, 1
      %s417 = scalar_select %p414, %s415, %s416
      %p420 = pneg %p414
      %p421 = scmp.eq.s32.totalorder %s29, 1
      %p422 = por %p420, %p421
      %p423 = scmp.ne.s32.totalorder %s415, %s418
      %p424 = scmp.eq.s32.totalorder %s29, 0
      %p425 = por %p423, %p424
      %p426 = scmp.ne.s32.totalorder %s415, %s418
      %p427 = scmp.eq.s32.totalorder %s34, 1
      %p428 = por %p426, %p427
      %p429 = scmp.ne.s32.totalorder %s418, %s419
      %p430 = scmp.eq.s32.totalorder %s34, 0
      %p431 = por %p429, %p430
      %p432 = scmp.ne.s32.totalorder %s418, %s419
      %p433 = scmp.eq.s32.totalorder %s35, 1
      %p434 = por %p432, %p433
      %p436 = scmp.ne.s32.totalorder %s419, %s435
      %p437 = scmp.eq.s32.totalorder %s35, 0
      %p438 = por %p436, %p437
      %p439 = scmp.le.s32.totalorder 1, %s29
      %p440 = scmp.lt.s32.totalorder %s29, 3
      %p441 = pnand %p439, %p440
      %p442 = pneg %p441
      // Predicated region
      $region9: #{tpu_custom_call.1} parent=5 // pred_check
        _
      $region10: #{tpu_custom_call.1} parent=5 // pred_check_branch
        %444 = sbr.rel (%p441) target = $region12
      $region11: #{tpu_custom_call.1} parent=5 // pred_region
        %s445 = ssub.s32 %s29, 1
        // Predicated region
        $region13: #{tpu_custom_call.1} parent=11 // pred_check
          %p446 = pneg %p88
        $region14: #{tpu_custom_call.1} parent=11 // pred_check_branch
          %448 = sbr.rel (%p446) target = $region16
        $region15: #{tpu_custom_call.1} parent=11 // pred_region
          %450 = vsyncadd [#allocation5], 0
          %s452 = sshll.u32 %s1, 4
          %s453 = int_to_ptr.hbm [resolvable:$true] %s452
          %s454 = sshll.u32 [#allocation4], 4
          %s455 = int_to_ptr.vmem [resolvable:$true] %s454
          %457 = dma.hbm_to_vmem [thread:$0]  %s453, 16, %s455, [#allocation5]
        $region16: #{tpu_custom_call.1} parent=11 // pred_fallthru
          _
        // Predicated region
        $region17: #{tpu_custom_call.1} parent=11 // pred_check
          %p458 = pneg %p109
        $region18: #{tpu_custom_call.1} parent=11 // pred_check_branch
          %460 = sbr.rel (%p458) target = $region20
        $region19: #{tpu_custom_call.1} parent=11 // pred_region
          _
        $region20: #{tpu_custom_call.1} parent=11 // pred_fallthru
          _
        // Predicated region
        $region21: #{tpu_custom_call.1} parent=11 // pred_check
          %p461 = pneg %p130
        $region22: #{tpu_custom_call.1} parent=11 // pred_check_branch
          %463 = sbr.rel (%p461) target = $region24
        $region23: #{tpu_custom_call.1} parent=11 // pred_region
          _
        $region24: #{tpu_custom_call.1} parent=11 // pred_fallthru
          _
        // Predicated region
        $region25: #{tpu_custom_call.1} parent=11 // pred_check
          %p464 = pneg %p151
        $region26: #{tpu_custom_call.1} parent=11 // pred_check_branch
          %466 = sbr.rel (%p464) target = $region28
        $region27: #{tpu_custom_call.1} parent=11 // pred_region
          _
        $region28: #{tpu_custom_call.1} parent=11 // pred_fallthru
          _
        // Predicated region
        $region29: #{tpu_custom_call.1} parent=11 // pred_check
          %p467 = pneg %p172
        $region30: #{tpu_custom_call.1} parent=11 // pred_check_branch
          %469 = sbr.rel (%p467) target = $region32
        $region31: #{tpu_custom_call.1} parent=11 // pred_region
          _
        $region32: #{tpu_custom_call.1} parent=11 // pred_fallthru
          _
        // Predicated region
        $region33: #{tpu_custom_call.1} parent=11 // pred_check
          %p470 = pneg %p193
        $region34: #{tpu_custom_call.1} parent=11 // pred_check_branch
          %472 = sbr.rel (%p470) target = $region36
        $region35: #{tpu_custom_call.1} parent=11 // pred_region
          _
        $region36: #{tpu_custom_call.1} parent=11 // pred_fallthru
          _
        // Predicated region
        $region37: #{tpu_custom_call.1} parent=11 // pred_check
          %p473 = pneg %p214
        $region38: #{tpu_custom_call.1} parent=11 // pred_check_branch
          %475 = sbr.rel (%p473) target = $region40
        $region39: #{tpu_custom_call.1} parent=11 // pred_region
          %477 = vsyncadd [#allocation8], 0
          %s478 = sshll.u32 %s7, 4
          %s479 = int_to_ptr.hbm [resolvable:$true] %s478
          %s480 = sshll.u32 [#allocation7], 4
          %s481 = int_to_ptr.vmem [resolvable:$true] %s480
          %486 = dma.hbm_to_vmem [thread:$0]  %s479, 256, %s481, [#allocation8], 64, 64, 4
        $region40: #{tpu_custom_call.1} parent=11 // pred_fallthru
          _
        // Predicated region
        $region41: #{tpu_custom_call.1} parent=11 // pred_check
          %p487 = pneg %p235
        $region42: #{tpu_custom_call.1} parent=11 // pred_check_branch
          %489 = sbr.rel (%p487) target = $region44
        $region43: #{tpu_custom_call.1} parent=11 // pred_region
          _
        $region44: #{tpu_custom_call.1} parent=11 // pred_fallthru
          _
        // Predicated region
        $region45: #{tpu_custom_call.1} parent=11 // pred_check
          %p490 = pneg %p256
        $region46: #{tpu_custom_call.1} parent=11 // pred_check_branch
          %492 = sbr.rel (%p490) target = $region48
        $region47: #{tpu_custom_call.1} parent=11 // pred_region
          %494 = vsyncadd [#allocation8], 0
          %s495 = sshll.u32 %s9, 4
          %s496 = int_to_ptr.hbm [resolvable:$true] %s495
          %s497 = sshll.u32 [#allocation9], 4
          %s498 = int_to_ptr.vmem [resolvable:$true] %s497
          %503 = dma.hbm_to_vmem [thread:$0]  %s496, 256, %s498, [#allocation8], 64, 64, 4
        $region48: #{tpu_custom_call.1} parent=11 // pred_fallthru
          _
        // Predicated region
        $region49: #{tpu_custom_call.1} parent=11 // pred_check
          %p504 = pneg %p277
        $region50: #{tpu_custom_call.1} parent=11 // pred_check_branch
          %506 = sbr.rel (%p504) target = $region52
        $region51: #{tpu_custom_call.1} parent=11 // pred_region
          _
        $region52: #{tpu_custom_call.1} parent=11 // pred_fallthru
          _
        // Predicated region
        $region53: #{tpu_custom_call.1} parent=11 // pred_check
          %p507 = pneg %p298
        $region54: #{tpu_custom_call.1} parent=11 // pred_check_branch
          %509 = sbr.rel (%p507) target = $region56
        $region55: #{tpu_custom_call.1} parent=11 // pred_region
          _
        $region56: #{tpu_custom_call.1} parent=11 // pred_fallthru
          _
        // Predicated region
        $region57: #{tpu_custom_call.1} parent=11 // pred_check
          %p510 = pneg %p319
        $region58: #{tpu_custom_call.1} parent=11 // pred_check_branch
          %512 = sbr.rel (%p510) target = $region60
        $region59: #{tpu_custom_call.1} parent=11 // pred_region
          _
        $region60: #{tpu_custom_call.1} parent=11 // pred_fallthru
          _
        // Predicated region
        $region61: #{tpu_custom_call.1} parent=11 // pred_check
          %p513 = pneg %p340
        $region62: #{tpu_custom_call.1} parent=11 // pred_check_branch
          %515 = sbr.rel (%p513) target = $region64
        $region63: #{tpu_custom_call.1} parent=11 // pred_region
          %517 = vsyncadd [#allocation11], 0
          %s518 = sshll.u32 %s13, 4
          %s519 = int_to_ptr.hbm [resolvable:$true] %s518
          %s520 = sshll.u32 [#allocation10], 4
          %s521 = int_to_ptr.vmem [resolvable:$true] %s520
          %526 = dma.hbm_to_vmem [thread:$0]  %s519, 256, %s521, [#allocation11], 64, 64, 4
        $region64: #{tpu_custom_call.1} parent=11 // pred_fallthru
          _
        // Predicated region
        $region65: #{tpu_custom_call.1} parent=11 // pred_check
          %p527 = pneg %p361
        $region66: #{tpu_custom_call.1} parent=11 // pred_check_branch
          %529 = sbr.rel (%p527) target = $region68
        $region67: #{tpu_custom_call.1} parent=11 // pred_region
          _
        $region68: #{tpu_custom_call.1} parent=11 // pred_fallthru
          _
        // Predicated region
        $region69: #{tpu_custom_call.1} parent=11 // pred_check
          %p530 = pneg %p382
        $region70: #{tpu_custom_call.1} parent=11 // pred_check_branch
          %532 = sbr.rel (%p530) target = $region72
        $region71: #{tpu_custom_call.1} parent=11 // pred_region
          _
        $region72: #{tpu_custom_call.1} parent=11 // pred_fallthru
          _
        // Predicated region
        $region73: #{tpu_custom_call.1} parent=11 // pred_check
          %p533 = pneg %p403
        $region74: #{tpu_custom_call.1} parent=11 // pred_check_branch
          %535 = sbr.rel (%p533) target = $region76
        $region75: #{tpu_custom_call.1} parent=11 // pred_region
          _
        $region76: #{tpu_custom_call.1} parent=11 // pred_fallthru
          _
      $region12: #{tpu_custom_call.1} parent=5 // pred_fallthru
        _
      %p536 = scmp.lt.s32.totalorder %s29, 2
      // Predicated region
      $region77: #{tpu_custom_call.1} parent=5 // pred_check
        %p537 = pneg %p536
      $region78: #{tpu_custom_call.1} parent=5 // pred_check_branch
        %539 = sbr.rel (%p537) target = $region80
      $region79: #{tpu_custom_call.1} parent=5 // pred_region
        // Predicated region
        $region81: #{tpu_custom_call.1} parent=79 // pred_check
          %p540 = pneg %p61
        $region82: #{tpu_custom_call.1} parent=79 // pred_check_branch
          %542 = sbr.rel (%p540) target = $region84
        $region83: #{tpu_custom_call.1} parent=79 // pred_region
          %p543 = scmp.lt.s32.totalorder %s36, 1
          %s544 = scalar_select %p543, %s36, 1
          %s545 = smul.addr %s544, 8
          %s546 = scalar_lea.vmem %s0, %s545
        $region84: #{tpu_custom_call.1} parent=79 // pred_fallthru
          _
      $region80: #{tpu_custom_call.1} parent=5 // pred_fallthru
        _
      %p547 = scmp.le.s32.totalorder 1, %s29
      %p548 = scmp.lt.s32.totalorder %s29, 3
      %p549 = pnand %p547, %p548
      %p550 = pneg %p549
      // Predicated region
      $region85: #{tpu_custom_call.1} parent=5 // pred_check
        _
      $region86: #{tpu_custom_call.1} parent=5 // pred_check_branch
        %552 = sbr.rel (%p549) target = $region88
      $region87: #{tpu_custom_call.1} parent=5 // pred_region
        %s553 = ssub.s32 %s29, 1
        // Predicated region
        $region89: #{tpu_custom_call.1} parent=87 // pred_check
          %p554 = pneg %p88
        $region90: #{tpu_custom_call.1} parent=87 // pred_check_branch
          %556 = sbr.rel (%p554) target = $region92
        $region91: #{tpu_custom_call.1} parent=87 // pred_region
          %558 = dma.done [#allocation5], 16
        $region92: #{tpu_custom_call.1} parent=87 // pred_fallthru
          _
        // Predicated region
        $region93: #{tpu_custom_call.1} parent=87 // pred_check
          %p559 = pneg %p214
        $region94: #{tpu_custom_call.1} parent=87 // pred_check_branch
          %561 = sbr.rel (%p559) target = $region96
        $region95: #{tpu_custom_call.1} parent=87 // pred_region
          %563 = dma.done [#allocation8], 256
        $region96: #{tpu_custom_call.1} parent=87 // pred_fallthru
          _
        // Predicated region
        $region97: #{tpu_custom_call.1} parent=87 // pred_check
          %p564 = pneg %p256
        $region98: #{tpu_custom_call.1} parent=87 // pred_check_branch
          %566 = sbr.rel (%p564) target = $region100
        $region99: #{tpu_custom_call.1} parent=87 // pred_region
          %568 = dma.done [#allocation8], 256
        $region100: #{tpu_custom_call.1} parent=87 // pred_fallthru
          _
        // Predicated region
        $region101: #{tpu_custom_call.1} parent=87 // pred_check
          %p569 = pneg %p340
        $region102: #{tpu_custom_call.1} parent=87 // pred_check_branch
          %571 = sbr.rel (%p569) target = $region104
        $region103: #{tpu_custom_call.1} parent=87 // pred_region
          %573 = dma.done [#allocation11], 256
        $region104: #{tpu_custom_call.1} parent=87 // pred_fallthru
          _
        %p574 = scmp.lt.s32.totalorder %s38, 1
        %s575 = scalar_select %p574, %s38, 1
        %s576 = smul.addr %s575, 8
        %s577 = scalar_lea.vmem %s0, %s576
        %p578 = pneg %p67
        %p579 = pneg %p64
        %p580 = pneg %p88
        %p581 = pneg %p85
        %p582 = pneg %p109
        %p583 = pneg %p106
        %p584 = pneg %p130
        %p585 = pneg %p127
        %p586 = pneg %p151
        %p587 = pneg %p148
        %p588 = pneg %p172
        %p589 = pneg %p169
        %p590 = pneg %p193
        %p591 = pneg %p190
        %p592 = pneg %p214
        %p593 = pneg %p211
        %p594 = pneg %p235
        %p595 = pneg %p232
        %p596 = pneg %p256
        %p597 = pneg %p253
        %p598 = pneg %p277
        %p599 = pneg %p274
        %p600 = pneg %p298
        %p601 = pneg %p295
        %p602 = pneg %p319
        %p603 = pneg %p316
        %p604 = pneg %p340
        %p605 = pneg %p337
        %p606 = pneg %p361
        %p607 = pneg %p358
        %p608 = pneg %p382
        %p609 = pneg %p379
        %p610 = pneg %p403
        %p611 = pneg %p400
        %p612 = pneg %p431
        %p613 = pneg %p428
        %s614 = sand.u32 %s418, 1
        %s615 = scalar_lea.sflag [#allocation6], %s614
        %s616 = sand.u32 %s418, 1
        %s617 = smul.addr %s616, 8
        %s618 = scalar_lea.vmem [#allocation12], %s617
        %p619 = scmp.lt.s32.totalorder %s38, 1
        %s620 = scalar_select %p619, %s38, 1
        %s621 = smul.addr %s620, 8
        %s622 = scalar_lea.vmem %s0, %s621
        %v624 = vld [vmem:[#allocation4] sm:$0x1]
        %v625 = vld [vmem:[%s2] sm:$0x1]
        %p626 = scmp.eq.s32.totalorder %s39, 0
        // Predicated region
        $region105: #{tpu_custom_call.1} parent=87 // pred_check
          %p627 = pneg %p626
        $region106: #{tpu_custom_call.1} parent=87 // pred_check_branch
          %629 = sbr.rel (%p627) target = $region108
        $region107: #{tpu_custom_call.1} parent=87 // pred_region
          %v630 = vld [vmem:[%s622] sm:$0xff]
          %vm631 = vcmask 261120
          %v632 = vsel %vm631, %v630, 0.0
          %633 = vadd.xlane.f32.xlu0 %v632
          %v634 = vpop.xlane.xlu0 %633
          %v635 = vrcp.pop 32.0
          %v636 = vmul.f32 32.0, %v635
          %v637 = vsub.f32 1.0, %v636
          %v638 = vmul.f32 %v635, %v637
          %v639 = vadd.f32 %v635, %v638
          %vm640 = vweird.f32 %v635
          %v641 = vsel %vm640, %v635, %v639
          %v642 = vmul.f32 %v634, %v641
          %v643 = vmul.f32 %v630, %v630
          %v644 = vsel %vm631, %v643, 0.0
          %645 = vadd.xlane.f32.xlu0 %v644
          %v646 = vpop.xlane.xlu0 %645
          %v647 = vmul.f32 %v646, %v641
          %v648 = vmul.f32 %v642, %v642
          %v649 = vsub.f32 %v647, %v648
          %v650 = vmax.f32 %v649, 0.0
          %v651 = vsub.f32 %v630, %v642
          %v652 = vadd.f32 %v650, 1e-05
          %v653 = vrsqrt.pop %v652
          %v654 = vmul.f32 %v653, %v652
          %v655 = vmul.f32 %v654, %v653
          %v656 = vmul.f32 0.5, %v655
          %v657 = vsub.f32 1.5, %v656
          %v658 = vmul.f32 %v653, %v657
          %vm659 = vweird.f32 %v652
          %vm660 = vweird.f32 %v653
          %vm661 = vmor %vm659, %vm660
          %v662 = vsel %vm661, %v653, %v658
          %v663 = vmul.f32 %v651, %v662
          %v665 = vperm.slane %v624, 0
          %v667 = vmul.f32 %v663, %v665
          %v669 = vperm.slane %v625, 0
          %v671 = vadd.f32 %v667, %v669
          %v672 = vpack.c.bf16 %v671, %v671
          %v673 = vld [vmem:[%s5] sm:$0xf]
          %v674 = vld [vmem:[%s5 + $0x4] sm:$0xf]
          %v675 = vld [vmem:[%s5 + $0x8] sm:$0xf]
          %v676 = vld [vmem:[%s5 + $0xc] sm:$0xf]
          %v677 = vld [vmem:[%s6] sm:$0x1]
          %v679 = vperm.slane %v677, 0
          %v685 = vunpack.c.l.b16 %v673
          %v686 = vunpack.c.l.b16 %v674
          %v687 = vunpack.c.l.b16 %v675
          %v688 = vunpack.c.l.b16 %v676
          %v689 = vpack.c.b16 %v686, %v685
          %v690 = vpack.c.b16 %v688, %v687
          %v694 = vsel %vm631, %v672, 0
          %696 = vmatpush.bf16.msra.mxu0 0
          %697 = vmatpush.bf16.msra.mxu0 0
          %698 = vmatpush.bf16.msra.mxu0 0
          %699 = vmatpush.bf16.msra.mxu0 0
          %700 = vmatpush.bf16.msra.mxu0 0
          %701 = vmatpush.bf16.msra.mxu0 0
          %702 = vmatpush.bf16.msra.mxu0 %v690
          %703 = vmatpush.bf16.msra.mxu0 %v689
          %704 = vmatmul.bf16.gmra.mxu0 %v694
          %v705 = vpop.f32.mrf.mxu0
          %v706 = vadd.f32 %v679, %v705
          %v707 = vpop.f32.mrf.mxu0
          %708 = vdwg.mxu0
          %v709 = vld [vmem:[#allocation7] sm:$0xf]
          %v710 = vld [vmem:[#allocation7 + $0x4] sm:$0xf]
          %v711 = vld [vmem:[#allocation7 + $0x8] sm:$0xf]
          %v712 = vld [vmem:[#allocation7 + $0xc] sm:$0xf]
          %v713 = vld [vmem:[%s8] sm:$0x1]
          %v715 = vperm.slane %v713, 0
          %v721 = vunpack.c.l.b16 %v709
          %v722 = vunpack.c.l.b16 %v710
          %v723 = vunpack.c.l.b16 %v711
          %v724 = vunpack.c.l.b16 %v712
          %v725 = vpack.c.b16 %v722, %v721
          %v726 = vpack.c.b16 %v724, %v723
          %729 = vmatpush.bf16.msra.mxu0 0
          %730 = vmatpush.bf16.msra.mxu0 0
          %731 = vmatpush.bf16.msra.mxu0 0
          %732 = vmatpush.bf16.msra.mxu0 0
          %733 = vmatpush.bf16.msra.mxu0 0
          %734 = vmatpush.bf16.msra.mxu0 0
          %735 = vmatpush.bf16.msra.mxu0 %v726
          %736 = vmatpush.bf16.msra.mxu0 %v725
          %737 = vmatmul.bf16.gmra.mxu0 %v694
          %v738 = vpop.f32.mrf.mxu0
          %v739 = vadd.f32 %v715, %v738
          %v740 = vpop.f32.mrf.mxu0
          %741 = vdwg.mxu0
          %v742 = vpack.c.bf16 %v706, %v706
          %vm743 = vcmask 257024
          %744 = vst.msk [vmem:[#allocation2] sm:$0xf] %vm743, %v742
          %v745 = vpack.c.bf16 %v739, %v739
          %746 = vst.msk [vmem:[#allocation3] sm:$0xf] %vm743, %v745
        $region108: #{tpu_custom_call.1} parent=87 // pred_fallthru
          _
        %s747 = smul.u32 %s39, 8
        %s748 = scalar_lea.vmem %s622, %s747
        %v749 = vld [vmem:[%s748] sm:$0xff]
        %vm750 = vcmask 261120
        %v751 = vsel %vm750, %v749, 0.0
        %752 = vadd.xlane.f32.xlu0 %v751
        %v753 = vpop.xlane.xlu0 %752
        %v754 = vrcp.pop 32.0
        %v755 = vmul.f32 32.0, %v754
        %v756 = vsub.f32 1.0, %v755
        %v757 = vmul.f32 %v754, %v756
        %v758 = vadd.f32 %v754, %v757
        %vm759 = vweird.f32 %v754
        %v760 = vsel %vm759, %v754, %v758
        %v761 = vmul.f32 %v753, %v760
        %v762 = vmul.f32 %v749, %v749
        %v763 = vsel %vm750, %v762, 0.0
        %764 = vadd.xlane.f32.xlu0 %v763
        %v765 = vpop.xlane.xlu0 %764
        %v766 = vmul.f32 %v765, %v760
        %v767 = vmul.f32 %v761, %v761
        %v768 = vsub.f32 %v766, %v767
        %v769 = vmax.f32 %v768, 0.0
        %v770 = vsub.f32 %v749, %v761
        %v771 = vadd.f32 %v769, 1e-05
        %v772 = vrsqrt.pop %v771
        %v773 = vmul.f32 %v772, %v771
        %v774 = vmul.f32 %v773, %v772
        %v775 = vmul.f32 0.5, %v774
        %v776 = vsub.f32 1.5, %v775
        %v777 = vmul.f32 %v772, %v776
        %vm778 = vweird.f32 %v771
        %vm779 = vweird.f32 %v772
        %vm780 = vmor %vm778, %vm779
        %v781 = vsel %vm780, %v772, %v777
        %v782 = vmul.f32 %v770, %v781
        %v784 = vperm.slane %v624, 0
        %v786 = vmul.f32 %v782, %v784
        %v788 = vperm.slane %v625, 0
        %v790 = vadd.f32 %v786, %v788
        %v791 = vpack.c.bf16 %v790, %v790
        %v792 = vld [vmem:[%s3] sm:$0xf]
        %v793 = vld [vmem:[%s3 + $0x4] sm:$0xf]
        %v794 = vld [vmem:[%s3 + $0x8] sm:$0xf]
        %v795 = vld [vmem:[%s3 + $0xc] sm:$0xf]
        %v796 = vld [vmem:[%s4] sm:$0x1]
        %v798 = vperm.slane %v796, 0
        %v804 = vunpack.c.l.b16 %v792
        %v805 = vunpack.c.l.b16 %v793
        %v806 = vunpack.c.l.b16 %v794
        %v807 = vunpack.c.l.b16 %v795
        %v808 = vpack.c.b16 %v805, %v804
        %v809 = vpack.c.b16 %v807, %v806
        %v813 = vsel %vm750, %v791, 0
        %815 = vmatpush.bf16.msra.mxu0 0
        %816 = vmatpush.bf16.msra.mxu0 0
        %817 = vmatpush.bf16.msra.mxu0 0
        %818 = vmatpush.bf16.msra.mxu0 0
        %819 = vmatpush.bf16.msra.mxu0 0
        %820 = vmatpush.bf16.msra.mxu0 0
        %821 = vmatpush.bf16.msra.mxu0 %v809
        %822 = vmatpush.bf16.msra.mxu0 %v808
        %823 = vmatmul.bf16.gmra.mxu0 %v813
        %v824 = vpop.f32.mrf.mxu0
        %v825 = vadd.f32 %v798, %v824
        %v826 = vpop.f32.mrf.mxu0
        %827 = vdwg.mxu0
        %v828 = vmul.f32 %v825, 0.35355338
        %v829 = vpack.c.bf16 %v828, %v828
        %v830 = vld [vmem:[#allocation2] sm:$0xf]
        %v831 = vld [vmem:[#allocation3] sm:$0xf]
        %vm832 = vcmask 64512
        %v834 = vsel %vm832, %v829, 0
        %v837 = vsel %vm832, %v830, 0
        %839 = vmatpush.bf16.xpose.msra.mxu0 0
        %840 = vmatpush.bf16.xpose.msra.mxu0 0
        %841 = vmatpush.bf16.xpose.msra.mxu0 0
        %842 = vmatpush.bf16.xpose.msra.mxu0 0
        %843 = vmatpush.bf16.xpose.msra.mxu0 0
        %844 = vmatpush.bf16.xpose.msra.mxu0 0
        %845 = vmatpush.bf16.xpose.msra.mxu0 0
        %846 = vmatpush.bf16.xpose.msra.mxu0 %v837
        %847 = vmatmul.bf16.gmra.mxu0 %v834
        %v848 = vpop.f32.mrf.mxu0
        %v849 = vadd.f32 0.0, %v848
        %v850 = vpop.f32.mrf.mxu0
        %851 = vdwg.mxu0
        %v852 = vsel %vm832, %v849, -inf
        %853 = vmax.xlane.f32.xlu0 %v852
        %v854 = vpop.xlane.xlu0 %853
        %v855 = vsub.f32 %v849, %v854
        %v856 = vmul.f32 %v855, 1.442695
        %v857 = vpow.pop %v856
        %v858 = vsel %vm832, %v857, 0.0
        %859 = vadd.xlane.f32.xlu0 %v858
        %v860 = vpop.xlane.xlu0 %859
        %v861 = vrcp.pop %v860
        %v862 = vmul.f32 %v857, %v861
        %v863 = vpack.c.bf16 %v862, %v862
        %v865 = vsel %vm832, %v863, 0
        %vm867 = vcmask 1043456
        %v869 = vsel %vm867, %v831, 0
        %871 = vmatpush.bf16.msra.mxu0 0
        %872 = vmatpush.bf16.msra.mxu0 0
        %873 = vmatpush.bf16.msra.mxu0 0
        %874 = vmatpush.bf16.msra.mxu0 0
        %875 = vmatpush.bf16.msra.mxu0 0
        %876 = vmatpush.bf16.msra.mxu0 0
        %877 = vmatpush.bf16.msra.mxu0 0
        %878 = vmatpush.bf16.msra.mxu0 %v869
        %879 = vmatmul.bf16.gmra.mxu0 %v865
        %v880 = vpop.f32.mrf.mxu0
        %v881 = vadd.f32 0.0, %v880
        %v882 = vpop.f32.mrf.mxu0
        %883 = vdwg.mxu0
        %v884 = vpack.c.bf16 %v881, %v881
        %v885 = vld [vmem:[#allocation9] sm:$0xf]
        %v886 = vld [vmem:[#allocation2] sm:$0xf]
        %v887 = vld [vmem:[#allocation3] sm:$0xf]
        %v889 = vunpack.c.l.b16 %v829
        %v890 = vpack.c.b16 %v889, %v889
        %891 = vrot.lane.b32.xlu0 %v890, 120
        %v892 = vpop.permute.xlu0 %891
        %v894 = vunpack.c.l.b16 %v886
        %v895 = vpack.c.b16 %v894, %v894
        %896 = vrot.lane.b32.xlu0 %v895, 120
        %v897 = vpop.permute.xlu0 %896
        %v899 = vsel %vm832, %v892, 0
        %v902 = vsel %vm832, %v897, 0
        %904 = vmatpush.bf16.xpose.msra.mxu0 0
        %905 = vmatpush.bf16.xpose.msra.mxu0 0
        %906 = vmatpush.bf16.xpose.msra.mxu0 0
        %907 = vmatpush.bf16.xpose.msra.mxu0 0
        %908 = vmatpush.bf16.xpose.msra.mxu0 0
        %909 = vmatpush.bf16.xpose.msra.mxu0 0
        %910 = vmatpush.bf16.xpose.msra.mxu0 0
        %911 = vmatpush.bf16.xpose.msra.mxu0 %v902
        %912 = vmatmul.bf16.gmra.mxu0 %v899
        %v913 = vpop.f32.mrf.mxu0
        %v914 = vadd.f32 0.0, %v913
        %v915 = vpop.f32.mrf.mxu0
        %916 = vdwg.mxu0
        %v917 = vsel %vm832, %v914, -inf
        %918 = vmax.xlane.f32.xlu0 %v917
        %v919 = vpop.xlane.xlu0 %918
        %v920 = vsub.f32 %v914, %v919
        %v921 = vmul.f32 %v920, 1.442695
        %v922 = vpow.pop %v921
        %v923 = vsel %vm832, %v922, 0.0
        %924 = vadd.xlane.f32.xlu0 %v923
        %v925 = vpop.xlane.xlu0 %924
        %v926 = vrcp.pop %v925
        %v927 = vmul.f32 %v922, %v926
        %v928 = vpack.c.bf16 %v927, %v927
        %v930 = vunpack.c.l.b16 %v887
        %v931 = vpack.c.b16 %v930, %v930
        %932 = vrot.lane.b32.xlu0 %v931, 120
        %v933 = vpop.permute.xlu0 %932
        %v935 = vsel %vm832, %v928, 0
        %v938 = vsel %vm867, %v933, 0
        %940 = vmatpush.bf16.msra.mxu0 0
        %941 = vmatpush.bf16.msra.mxu0 0
        %942 = vmatpush.bf16.msra.mxu0 0
        %943 = vmatpush.bf16.msra.mxu0 0
        %944 = vmatpush.bf16.msra.mxu0 0
        %945 = vmatpush.bf16.msra.mxu0 0
        %946 = vmatpush.bf16.msra.mxu0 0
        %947 = vmatpush.bf16.msra.mxu0 %v938
        %948 = vmatmul.bf16.gmra.mxu0 %v935
        %v949 = vpop.f32.mrf.mxu0
        %v950 = vadd.f32 0.0, %v949
        %v951 = vpop.f32.mrf.mxu0
        %952 = vdwg.mxu0
        %v953 = vpack.c.bf16 %v950, %v950
        %v954 = vld [vmem:[#allocation9 + $0x4] sm:$0xf]
        %v956 = vsel %vm832, %v953, 0
        %v959 = vsel %vm867, %v954, 0
        %961 = vmatpush.bf16.msra.mxu0 0
        %962 = vmatpush.bf16.msra.mxu0 0
        %963 = vmatpush.bf16.msra.mxu0 0
        %964 = vmatpush.bf16.msra.mxu0 0
        %965 = vmatpush.bf16.msra.mxu0 0
        %966 = vmatpush.bf16.msra.mxu0 0
        %967 = vmatpush.bf16.msra.mxu0 0
        %968 = vmatpush.bf16.msra.mxu0 %v959
        %969 = vmatmul.bf16.gmra.mxu0 %v956
        %v970 = vpop.f32.mrf.mxu0
        %v971 = vadd.f32 0.0, %v970
        %v972 = vpop.f32.mrf.mxu0
        %973 = vdwg.mxu0
        %v975 = vsel %vm832, %v884, 0
        %v978 = vsel %vm867, %v885, 0
        %980 = vmatpush.bf16.msra.mxu0 0
        %981 = vmatpush.bf16.msra.mxu0 0
        %982 = vmatpush.bf16.msra.mxu0 0
        %983 = vmatpush.bf16.msra.mxu0 0
        %984 = vmatpush.bf16.msra.mxu0 0
        %985 = vmatpush.bf16.msra.mxu0 0
        %986 = vmatpush.bf16.msra.mxu0 0
        %987 = vmatpush.bf16.msra.mxu0 %v978
        %988 = vmatmul.bf16.gmra.mxu0 %v975
        %v989 = vpop.f32.mrf.mxu0
        %v990 = vadd.f32 %v971, %v989
        %v991 = vpop.f32.mrf.mxu0
        %992 = vdwg.mxu0
        %v993 = vld [vmem:[#allocation2] sm:$0xf]
        %v994 = vld [vmem:[#allocation3] sm:$0xf]
        %995 = vrot.lane.b32.xlu0 %v890, 112
        %v996 = vpop.permute.xlu0 %995
        %v998 = vunpack.c.l.b16 %v993
        %v999 = vpack.c.b16 %v998, %v998
        %1000 = vrot.lane.b32.xlu0 %v999, 112
        %v1001 = vpop.permute.xlu0 %1000
        %v1003 = vsel %vm832, %v996, 0
        %v1006 = vsel %vm832, %v1001, 0
        %1008 = vmatpush.bf16.xpose.msra.mxu0 0
        %1009 = vmatpush.bf16.xpose.msra.mxu0 0
        %1010 = vmatpush.bf16.xpose.msra.mxu0 0
        %1011 = vmatpush.bf16.xpose.msra.mxu0 0
        %1012 = vmatpush.bf16.xpose.msra.mxu0 0
        %1013 = vmatpush.bf16.xpose.msra.mxu0 0
        %1014 = vmatpush.bf16.xpose.msra.mxu0 0
        %1015 = vmatpush.bf16.xpose.msra.mxu0 %v1006
        %1016 = vmatmul.bf16.gmra.mxu0 %v1003
        %v1017 = vpop.f32.mrf.mxu0
        %v1018 = vadd.f32 0.0, %v1017
        %v1019 = vpop.f32.mrf.mxu0
        %1020 = vdwg.mxu0
        %v1021 = vsel %vm832, %v1018, -inf
        %1022 = vmax.xlane.f32.xlu0 %v1021
        %v1023 = vpop.xlane.xlu0 %1022
        %v1024 = vsub.f32 %v1018, %v1023
        %v1025 = vmul.f32 %v1024, 1.442695
        %v1026 = vpow.pop %v1025
        %v1027 = vsel %vm832, %v1026, 0.0
        %1028 = vadd.xlane.f32.xlu0 %v1027
        %v1029 = vpop.xlane.xlu0 %1028
        %v1030 = vrcp.pop %v1029
        %v1031 = vmul.f32 %v1026, %v1030
        %v1032 = vpack.c.bf16 %v1031, %v1031
        %v1034 = vunpack.c.l.b16 %v994
        %v1035 = vpack.c.b16 %v1034, %v1034
        %1036 = vrot.lane.b32.xlu0 %v1035, 112
        %v1037 = vpop.permute.xlu0 %1036
        %v1039 = vsel %vm832, %v1032, 0
        %v1042 = vsel %vm867, %v1037, 0
        %1044 = vmatpush.bf16.msra.mxu0 0
        %1045 = vmatpush.bf16.msra.mxu0 0
        %1046 = vmatpush.bf16.msra.mxu0 0
        %1047 = vmatpush.bf16.msra.mxu0 0
        %1048 = vmatpush.bf16.msra.mxu0 0
        %1049 = vmatpush.bf16.msra.mxu0 0
        %1050 = vmatpush.bf16.msra.mxu0 0
        %1051 = vmatpush.bf16.msra.mxu0 %v1042
        %1052 = vmatmul.bf16.gmra.mxu0 %v1039
        %v1053 = vpop.f32.mrf.mxu0
        %v1054 = vadd.f32 0.0, %v1053
        %v1055 = vpop.f32.mrf.mxu0
        %1056 = vdwg.mxu0
        %v1057 = vpack.c.bf16 %v1054, %v1054
        %v1058 = vld [vmem:[#allocation9 + $0x8] sm:$0xf]
        %v1060 = vsel %vm832, %v1057, 0
        %v1063 = vsel %vm867, %v1058, 0
        %1065 = vmatpush.bf16.msra.mxu0 0
        %1066 = vmatpush.bf16.msra.mxu0 0
        %1067 = vmatpush.bf16.msra.mxu0 0
        %1068 = vmatpush.bf16.msra.mxu0 0
        %1069 = vmatpush.bf16.msra.mxu0 0
        %1070 = vmatpush.bf16.msra.mxu0 0
        %1071 = vmatpush.bf16.msra.mxu0 0
        %1072 = vmatpush.bf16.msra.mxu0 %v1063
        %1073 = vmatmul.bf16.gmra.mxu0 %v1060
        %v1074 = vpop.f32.mrf.mxu0
        %v1075 = vadd.f32 0.0, %v1074
        %v1076 = vpop.f32.mrf.mxu0
        %1077 = vdwg.mxu0
        %v1078 = vadd.f32 %v990, %v1075
        %v1079 = vld [vmem:[#allocation2] sm:$0xf]
        %v1080 = vld [vmem:[#allocation3] sm:$0xf]
        %1081 = vrot.lane.b32.xlu0 %v890, 104
        %v1082 = vpop.permute.xlu0 %1081
        %v1084 = vunpack.c.l.b16 %v1079
        %v1085 = vpack.c.b16 %v1084, %v1084
        %1086 = vrot.lane.b32.xlu0 %v1085, 104
        %v1087 = vpop.permute.xlu0 %1086
        %v1089 = vsel %vm832, %v1082, 0
        %v1092 = vsel %vm832, %v1087, 0
        %1094 = vmatpush.bf16.xpose.msra.mxu0 0
        %1095 = vmatpush.bf16.xpose.msra.mxu0 0
        %1096 = vmatpush.bf16.xpose.msra.mxu0 0
        %1097 = vmatpush.bf16.xpose.msra.mxu0 0
        %1098 = vmatpush.bf16.xpose.msra.mxu0 0
        %1099 = vmatpush.bf16.xpose.msra.mxu0 0
        %1100 = vmatpush.bf16.xpose.msra.mxu0 0
        %1101 = vmatpush.bf16.xpose.msra.mxu0 %v1092
        %1102 = vmatmul.bf16.gmra.mxu0 %v1089
        %v1103 = vpop.f32.mrf.mxu0
        %v1104 = vadd.f32 0.0, %v1103
        %v1105 = vpop.f32.mrf.mxu0
        %1106 = vdwg.mxu0
        %v1107 = vsel %vm832, %v1104, -inf
        %1108 = vmax.xlane.f32.xlu0 %v1107
        %v1109 = vpop.xlane.xlu0 %1108
        %v1110 = vsub.f32 %v1104, %v1109
        %v1111 = vmul.f32 %v1110, 1.442695
        %v1112 = vpow.pop %v1111
        %v1113 = vsel %vm832, %v1112, 0.0
        %1114 = vadd.xlane.f32.xlu0 %v1113
        %v1115 = vpop.xlane.xlu0 %1114
        %v1116 = vrcp.pop %v1115
        %v1117 = vmul.f32 %v1112, %v1116
        %v1118 = vpack.c.bf16 %v1117, %v1117
        %v1120 = vunpack.c.l.b16 %v1080
        %v1121 = vpack.c.b16 %v1120, %v1120
        %1122 = vrot.lane.b32.xlu0 %v1121, 104
        %v1123 = vpop.permute.xlu0 %1122
        %v1125 = vsel %vm832, %v1118, 0
        %v1128 = vsel %vm867, %v1123, 0
        %1130 = vmatpush.bf16.msra.mxu0 0
        %1131 = vmatpush.bf16.msra.mxu0 0
        %1132 = vmatpush.bf16.msra.mxu0 0
        %1133 = vmatpush.bf16.msra.mxu0 0
        %1134 = vmatpush.bf16.msra.mxu0 0
        %1135 = vmatpush.bf16.msra.mxu0 0
        %1136 = vmatpush.bf16.msra.mxu0 0
        %1137 = vmatpush.bf16.msra.mxu0 %v1128
        %1138 = vmatmul.bf16.gmra.mxu0 %v1125
        %v1139 = vpop.f32.mrf.mxu0
        %v1140 = vadd.f32 0.0, %v1139
        %v1141 = vpop.f32.mrf.mxu0
        %1142 = vdwg.mxu0
        %v1143 = vpack.c.bf16 %v1140, %v1140
        %v1144 = vld [vmem:[#allocation9 + $0xc] sm:$0xf]
        %v1146 = vsel %vm832, %v1143, 0
        %v1149 = vsel %vm867, %v1144, 0
        %1151 = vmatpush.bf16.msra.mxu0 0
        %1152 = vmatpush.bf16.msra.mxu0 0
        %1153 = vmatpush.bf16.msra.mxu0 0
        %1154 = vmatpush.bf16.msra.mxu0 0
        %1155 = vmatpush.bf16.msra.mxu0 0
        %1156 = vmatpush.bf16.msra.mxu0 0
        %1157 = vmatpush.bf16.msra.mxu0 0
        %1158 = vmatpush.bf16.msra.mxu0 %v1149
        %1159 = vmatmul.bf16.gmra.mxu0 %v1146
        %v1160 = vpop.f32.mrf.mxu0
        %v1161 = vadd.f32 0.0, %v1160
        %v1162 = vpop.f32.mrf.mxu0
        %1163 = vdwg.mxu0
        %v1164 = vadd.f32 %v1078, %v1161
        %v1165 = vld [vmem:[%s10] sm:$0x1]
        %v1167 = vperm.slane %v1165, 0
        %v1169 = vadd.f32 %v1164, %v1167
        %v1170 = vadd.f32 %v749, %v1169
        %v1171 = vld [vmem:[%s11] sm:$0x1]
        %v1172 = vld [vmem:[%s12] sm:$0x1]
        %v1173 = vsel %vm750, %v1170, 0.0
        %1174 = vadd.xlane.f32.xlu0 %v1173
        %v1175 = vpop.xlane.xlu0 %1174
        %v1176 = vmul.f32 %v1175, %v760
        %v1177 = vmul.f32 %v1170, %v1170
        %v1178 = vsel %vm750, %v1177, 0.0
        %1179 = vadd.xlane.f32.xlu0 %v1178
        %v1180 = vpop.xlane.xlu0 %1179
        %v1181 = vmul.f32 %v1180, %v760
        %v1182 = vmul.f32 %v1176, %v1176
        %v1183 = vsub.f32 %v1181, %v1182
        %v1184 = vmax.f32 %v1183, 0.0
        %v1185 = vsub.f32 %v1170, %v1176
        %v1186 = vadd.f32 %v1184, 1e-05
        %v1187 = vrsqrt.pop %v1186
        %v1188 = vmul.f32 %v1187, %v1186
        %v1189 = vmul.f32 %v1188, %v1187
        %v1190 = vmul.f32 0.5, %v1189
        %v1191 = vsub.f32 1.5, %v1190
        %v1192 = vmul.f32 %v1187, %v1191
        %vm1193 = vweird.f32 %v1186
        %vm1194 = vweird.f32 %v1187
        %vm1195 = vmor %vm1193, %vm1194
        %v1196 = vsel %vm1195, %v1187, %v1192
        %v1197 = vmul.f32 %v1185, %v1196
        %v1199 = vperm.slane %v1171, 0
        %v1201 = vmul.f32 %v1197, %v1199
        %v1203 = vperm.slane %v1172, 0
        %v1205 = vadd.f32 %v1201, %v1203
        %v1206 = vpack.c.bf16 %v1205, %v1205
        %v1207 = vld [vmem:[#allocation10] sm:$0xf]
        %v1208 = vld [vmem:[#allocation10 + $0x4] sm:$0xf]
        %v1209 = vld [vmem:[#allocation10 + $0x8] sm:$0xf]
        %v1210 = vld [vmem:[#allocation10 + $0xc] sm:$0xf]
        %v1211 = vld [vmem:[%s14] sm:$0x1]
        %v1213 = vperm.slane %v1211, 0
        %v1219 = vunpack.c.l.b16 %v1207
        %v1220 = vunpack.c.l.b16 %v1208
        %v1221 = vunpack.c.l.b16 %v1209
        %v1222 = vunpack.c.l.b16 %v1210
        %v1223 = vpack.c.b16 %v1220, %v1219
        %v1224 = vpack.c.b16 %v1222, %v1221
        %v1228 = vsel %vm750, %v1206, 0
        %1230 = vmatpush.bf16.msra.mxu0 0
        %1231 = vmatpush.bf16.msra.mxu0 0
        %1232 = vmatpush.bf16.msra.mxu0 0
        %1233 = vmatpush.bf16.msra.mxu0 0
        %1234 = vmatpush.bf16.msra.mxu0 0
        %1235 = vmatpush.bf16.msra.mxu0 0
        %1236 = vmatpush.bf16.msra.mxu0 %v1224
        %1237 = vmatpush.bf16.msra.mxu0 %v1223
        %1238 = vmatmul.bf16.gmra.mxu0 %v1228
        %v1239 = vpop.f32.mrf.mxu0
        %v1240 = vadd.f32 %v1213, %v1239
        %v1241 = vpop.f32.mrf.mxu0
        %1242 = vdwg.mxu0
        %v1243 = vmul.f32 %v1240, 0.5
        %v1244 = vmul.f32 %v1240, 0.70710677
        %v1245 = vmul.f32 %v1244, %v1244
        %v1246 = vmin.f32 16.0, %v1245
        %v1247 = vmul.f32 %v1246, 2.1237322e-06
        %v1248 = vadd.f32 %v1247, 0.00028619796
        %v1249 = vmul.f32 %v1246, %v1248
        %v1250 = vadd.f32 %v1249, 0.0036580483
        %v1251 = vmul.f32 %v1246, %v1250
        %v1252 = vadd.f32 %v1251, 0.05243302
        %v1253 = vmul.f32 %v1246, %v1252
        %v1254 = vadd.f32 %v1253, 0.18741608
        %v1255 = vmul.f32 %v1246, %v1254
        %v1256 = vadd.f32 %v1255, 1.1283791
        %v1257 = vmul.f32 %v1244, %v1256
        %v1258 = vmul.f32 %v1246, 3.8918573e-05
        %v1259 = vadd.f32 %v1258, 0.001143296
        %v1260 = vmul.f32 %v1246, %v1259
        %v1261 = vadd.f32 %v1260, 0.014752088
        %v1262 = vmul.f32 %v1246, %v1261
        %v1263 = vadd.f32 %v1262, 0.112945676
        %v1264 = vmul.f32 %v1246, %v1263
        %v1265 = vadd.f32 %v1264, 0.4994258
        %v1266 = vmul.f32 %v1246, %v1265
        %v1267 = vadd.f32 %v1266, 1.0
        %v1268 = vrcp.pop %v1267
        %v1269 = vmul.f32 %v1267, %v1268
        %v1270 = vsub.f32 1.0, %v1269
        %v1271 = vmul.f32 %v1268, %v1270
        %v1272 = vadd.f32 %v1268, %v1271
        %vm1273 = vweird.f32 %v1267
        %vm1274 = vweird.f32 %v1268
        %vm1275 = vmor %vm1273, %vm1274
        %v1276 = vsel %vm1275, %v1268, %v1272
        %v1277 = vand.u32 2147483647, %v1267
        %vm1278 = vcmp.eq.f32.partialorder %v1277, 8.507059e+37
        %v1279 = vand.u32 %v1267, 2147483648
        %v1280 = vor.u32 1.1754944e-38, %v1279
        %v1281 = vsel %vm1278, %v1280, %v1276
        %v1282 = vmul.f32 %v1257, %v1281
        %v1283 = vmin.f32 %v1282, 1.0
        %v1284 = vmax.f32 %v1283, -1.0
        %v1285 = vadd.f32 %v1284, 1.0
        %v1286 = vmul.f32 %v1243, %v1285
        %v1287 = vpack.c.bf16 %v1286, %v1286
        %v1288 = vld [vmem:[%s15] sm:$0xf]
        %v1289 = vld [vmem:[%s15 + $0x4] sm:$0xf]
        %v1290 = vld [vmem:[%s15 + $0x8] sm:$0xf]
        %v1291 = vld [vmem:[%s15 + $0xc] sm:$0xf]
        %v1292 = vld [vmem:[%s15 + $0x10] sm:$0xf]
        %v1293 = vld [vmem:[%s15 + $0x14] sm:$0xf]
        %v1294 = vld [vmem:[%s15 + $0x18] sm:$0xf]
        %v1295 = vld [vmem:[%s15 + $0x1c] sm:$0xf]
        %v1296 = vld [vmem:[%s16] sm:$0x1]
        %v1298 = vperm.slane %v1296, 0
        %v1308 = vunpack.c.l.b16 %v1288
        %v1309 = vunpack.c.l.b16 %v1289
        %v1310 = vunpack.c.l.b16 %v1290
        %v1311 = vunpack.c.l.b16 %v1291
        %v1312 = vunpack.c.l.b16 %v1292
        %v1313 = vunpack.c.l.b16 %v1293
        %v1314 = vunpack.c.l.b16 %v1294
        %v1315 = vunpack.c.l.b16 %v1295
        %v1316 = vpack.c.b16 %v1309, %v1308
        %v1317 = vpack.c.b16 %v1311, %v1310
        %v1318 = vpack.c.b16 %v1313, %v1312
        %v1319 = vpack.c.b16 %v1315, %v1314
        %vm1324 = vcmask 523264
        %v1326 = vsel %vm1324, %v1287, 0
        %1328 = vmatpush.bf16.msra.mxu0 0
        %1329 = vmatpush.bf16.msra.mxu0 0
        %1330 = vmatpush.bf16.msra.mxu0 0
        %1331 = vmatpush.bf16.msra.mxu0 0
        %1332 = vmatpush.bf16.msra.mxu0 %v1319
        %1333 = vmatpush.bf16.msra.mxu0 %v1318
        %1334 = vmatpush.bf16.msra.mxu0 %v1317
        %1335 = vmatpush.bf16.msra.mxu0 %v1316
        %1336 = vmatmul.bf16.gmra.mxu0 %v1326
        %v1337 = vpop.f32.mrf.mxu0
        %v1338 = vadd.f32 %v1298, %v1337
        %v1339 = vpop.f32.mrf.mxu0
        %1340 = vdwg.mxu0
        %v1341 = vadd.f32 %v1170, %v1338
        %1342 = vst.msk [vmem:[%s618] sm:$0xff] %vm750, %v1341
        %s1343 = sand.u32 %s418, 1
        %s1344 = scalar_lea.sflag [#allocation6], %s1343
        %s1345 = sand.u32 %s418, 1
        %s1346 = smul.addr %s1345, 8
        %s1347 = scalar_lea.vmem [#allocation12], %s1346
        // Predicated region
        $region109: #{tpu_custom_call.1} parent=87 // pred_check
          %p1348 = pneg %p428
        $region110: #{tpu_custom_call.1} parent=87 // pred_check_branch
          %1350 = sbr.rel (%p1348) target = $region112
        $region111: #{tpu_custom_call.1} parent=87 // pred_region
          %1352 = vsyncadd %s1344, 0
          %s1353 = sadd.s32 %s39, %s38
          %s1354 = smul.addr %s1353, 8
          %s1355 = scalar_lea.hbm %s17, %s1354
          %s1357 = sshll.u32 %s1347, 4
          %s1358 = int_to_ptr.vmem [resolvable:$true] %s1357
          %s1359 = sshll.u32 %s1355, 4
          %s1360 = int_to_ptr.hbm [resolvable:$true] %s1359
          %1362 = dma.vmem_to_hbm [thread:$0]  %s1358, 128, %s1360, %s1344
        $region112: #{tpu_custom_call.1} parent=87 // pred_fallthru
          _
      $region88: #{tpu_custom_call.1} parent=5 // pred_fallthru
        _
      %p1363 = scmp.le.s32.totalorder 2, %s29
      // Predicated region
      $region113: #{tpu_custom_call.1} parent=5 // pred_check
        %p1364 = pneg %p1363
      $region114: #{tpu_custom_call.1} parent=5 // pred_check_branch
        %1366 = sbr.rel (%p1364) target = $region116
      $region115: #{tpu_custom_call.1} parent=5 // pred_region
        %s1367 = ssub.s32 %s29, 2
        // Predicated region
        $region117: #{tpu_custom_call.1} parent=115 // pred_check
          %p1368 = pneg %p434
        $region118: #{tpu_custom_call.1} parent=115 // pred_check_branch
          %1370 = sbr.rel (%p1368) target = $region120
        $region119: #{tpu_custom_call.1} parent=115 // pred_region
          %s1371 = sand.u32 %s419, 1
          %s1372 = scalar_lea.sflag [#allocation6], %s1371
          %s1373 = sand.u32 %s419, 1
          %s1374 = smul.addr %s1373, 8
          %s1375 = scalar_lea.vmem [#allocation12], %s1374
          %1377 = dma.done %s1372, 128
        $region120: #{tpu_custom_call.1} parent=115 // pred_fallthru
          _
      $region116: #{tpu_custom_call.1} parent=5 // pred_fallthru
        _
    $region6: #{tpu_custom_call.1} parent=1 // loop_footer
      %s33 = sadd.s32 1, %s29
    $region7: #{tpu_custom_call.1} parent=1 // loop_footer_branch
      %28 = sbr.rel target = $region3
    $region8: #{tpu_custom_call.1} parent=1 // loop_exit
      _
    %1378 = vsyncpa [#allocation5], 1
    %s1379 = scalar_lea.sflag [#allocation5], 1
    %1380 = vsyncpa %s1379, 1
    %1381 = vsyncpa [#allocation8], 1
    %1382 = vsyncpa [#allocation11], 1
    %1383 = vsyncpa [#allocation6], 1
    %s1384 = scalar_lea.sflag [#allocation6], 1
    %1385 = vsyncpa %s1384, 1

</llo_original>
